<compile_context>
chip_gen: v7x
topology: tpu7x:2x2x1
jax: 0.10.0
libtpu: 0.0.40
codegen_flags: <defaults>
</compile_context>

<pallas_src>
import functools

import jax
import jax.numpy as jnp
from jax.experimental import pallas as pl
from jax.experimental.pallas import tpu as pltpu

_EPS = 1e-5


def _round_up(x, m):
    return (x + m - 1) // m * m


def _choose_length_tile(L):
    """Lane-dense length tile (multiple of 128) with modest padding waste."""
    for cand in (512, 256):
        if _round_up(L, cand) - L <= cand // 4:
            return cand
    return 128


def _vmem_limit(est_bytes):
    return int(min(48 * 1024 * 1024, max(16 * 1024 * 1024, 2 * est_bytes)))


# --------------------------------------------------------------------------- #
# Pass 1: h1 = conv1(x); accumulate per-batch per-channel sum / sum-of-squares #
# --------------------------------------------------------------------------- #
def _conv1_stats_kernel(x_ref, w1_ref, b1_ref, sum_ref, sq_ref, *, seq_len, tile_l):
    l_idx = pl.program_id(1)

    @pl.when(l_idx == 0)
    def _init():
        sum_ref[...] = jnp.zeros_like(sum_ref)
        sq_ref[...] = jnp.zeros_like(sq_ref)

    x = x_ref[0].astype(jnp.bfloat16)                       # (Cp, TL)
    h = jnp.dot(w1_ref[...], x, preferred_element_type=jnp.float32) + b1_ref[...]

    if seq_len % tile_l != 0:                               # mask padded positions
        pos = l_idx * tile_l + jax.lax.broadcasted_iota(jnp.int32, (1, tile_l), 1)
        h = h * (pos < seq_len).astype(jnp.float32)

    sum_ref[0] += jnp.sum(h, axis=1, keepdims=True)         # (Cp, 1)
    sq_ref[0] += jnp.sum(h * h, axis=1, keepdims=True)


# --------------------------------------------------------------------------- #
# Pass 2: conv1 -> bn1(apply) -> relu -> conv2 ; write h2, accumulate bn2/SE   #
# --------------------------------------------------------------------------- #
def _conv_chain_kernel(x_ref, w1_ref, b1_ref, sc1_ref, sh1_ref, w2_ref, b2_ref,
                       h2_ref, sum_ref, sq_ref, *, seq_len, tile_l):
    l_idx = pl.program_id(1)

    @pl.when(l_idx == 0)
    def _init():
        sum_ref[...] = jnp.zeros_like(sum_ref)
        sq_ref[...] = jnp.zeros_like(sq_ref)

    x = x_ref[0].astype(jnp.bfloat16)                       # (Cp, TL)
    h1 = jnp.dot(w1_ref[...], x, preferred_element_type=jnp.float32) + b1_ref[...]
    h1 = jnp.maximum(h1 * sc1_ref[...] + sh1_ref[...], 0.0)  # bn1 + relu (precomputed scale/shift)
    h2 = jnp.dot(w2_ref[...], h1.astype(jnp.bfloat16),
                 preferred_element_type=jnp.float32) + b2_ref[...]
    h2_ref[0] = h2

    hm = h2
    if seq_len % tile_l != 0:
        pos = l_idx * tile_l + jax.lax.broadcasted_iota(jnp.int32, (1, tile_l), 1)
        hm = h2 * (pos < seq_len).astype(jnp.float32)

    sum_ref[0] += jnp.sum(hm, axis=1, keepdims=True)        # per-batch L-sum = SE pooling sum
    sq_ref[0] += jnp.sum(hm * hm, axis=1, keepdims=True)


# --------------------------------------------------------------------------- #
# Pass 3: bn2(apply) + SE channel scale + residual + final ReLU                #
# --------------------------------------------------------------------------- #
def _bn2_se_residual_kernel(x_ref, h2_ref, sc2_ref, sh2_ref, se_ref, o_ref):
    y = h2_ref[0] * sc2_ref[...] + sh2_ref[...]             # bn2
    y = y * se_ref[0]                                       # per-batch SE scale (Cp, 1)
    o_ref[0] = jnp.maximum(y + x_ref[0], 0.0)               # residual + final relu


@jax.jit
def se_basic_block(x_ncl, params):
    """SEBasicBlock forward. x_ncl: (B, C, L) float32 (PyTorch NCL). Returns (B, C, L)."""
    (w1, b1, g1, be1, w2, b2, g2, be2, fc1_w, fc2_w) = params
    B, C, L = x_ncl.shape

    Cp = _round_up(C, 16)           # sublane padding (bf16 packs 16 rows/vreg)
    TL = _choose_length_tile(L)     # lane-dense length tile (multiple of 128)
    Lp = _round_up(L, TL)
    nL = Lp // TL
    grid = (B, nL)

    # ---- pad parameters / input once (zero channels & positions are inert) ----
    def pad_vec(v):
        v = v.astype(jnp.float32)
        return v if Cp == C else jnp.pad(v, (0, Cp - C))

    def pad_mat(w):
        w = w.astype(jnp.float32)
        return w if Cp == C else jnp.pad(w, ((0, Cp - C), (0, Cp - C)))

    w1p = pad_mat(w1).astype(jnp.bfloat16)
    w2p = pad_mat(w2).astype(jnp.bfloat16)
    b1p = pad_vec(b1).reshape(Cp, 1)
    b2p = pad_vec(b2).reshape(Cp, 1)
    g1p, be1p = pad_vec(g1), pad_vec(be1)
    g2p, be2p = pad_vec(g2), pad_vec(be2)

    xp = x_ncl.astype(jnp.float32)
    if Cp != C or Lp != L:
        xp = jnp.pad(xp, ((0, 0), (0, Cp - C), (0, Lp - L)))

    tile_bytes = Cp * TL * 4
    w_bytes = Cp * Cp * 2

    x_spec = pl.BlockSpec((1, Cp, TL), lambda b, l: (b, 0, l))     # per-(batch, L-tile)
    wgt_spec = pl.BlockSpec((Cp, Cp), lambda b, l: (0, 0))         # resident weights
    cvec_spec = pl.BlockSpec((Cp, 1), lambda b, l: (0, 0))         # resident per-channel vecs
    bvec_spec = pl.BlockSpec((1, Cp, 1), lambda b, l: (b, 0, 0))   # per-batch vec / accumulator

    n = jnp.float32(B * L)

    # ---------------- pass 1: bn1 batch statistics ---------------- #
    s1, q1 = pl.pallas_call(
        functools.partial(_conv1_stats_kernel, seq_len=L, tile_l=TL),
        out_shape=(jax.ShapeDtypeStruct((B, Cp, 1), jnp.float32),
                   jax.ShapeDtypeStruct((B, Cp, 1), jnp.float32)),
        grid=grid,
        in_specs=[x_spec, wgt_spec, cvec_spec],
        out_specs=(bvec_spec, bvec_spec),
        compiler_params=pltpu.CompilerParams(
            dimension_semantics=("parallel", "arbitrary"),
            vmem_limit_bytes=_vmem_limit(2 * tile_bytes + 2 * w_bytes)),
        cost_estimate=pl.CostEstimate(
            flops=2 * B * Lp * Cp * Cp,
            transcendentals=0,
            bytes_accessed=B * Lp * Cp * 4 + w_bytes + 2 * B * Cp * 4),
    )(xp, w1p, b1p)

    sum1 = jnp.sum(s1[:, :, 0], axis=0)
    sumsq1 = jnp.sum(q1[:, :, 0], axis=0)
    mu1 = sum1 / n
    var1 = jnp.maximum(sumsq1 / n - mu1 * mu1, 0.0)          # f32, clamp >= 0
    scale1 = g1p * jax.lax.rsqrt(var1 + _EPS)
    shift1 = be1p - mu1 * scale1

    # ------- pass 2: conv1 -> bn1 -> relu -> conv2 ; bn2 / SE sums ------- #
    h2, s2, q2 = pl.pallas_call(
        functools.partial(_conv_chain_kernel, seq_len=L, tile_l=TL),
        out_shape=(jax.ShapeDtypeStruct((B, Cp, Lp), jnp.float32),
                   jax.ShapeDtypeStruct((B, Cp, 1), jnp.float32),
                   jax.ShapeDtypeStruct((B, Cp, 1), jnp.float32)),
        grid=grid,
        in_specs=[x_spec, wgt_spec, cvec_spec, cvec_spec, cvec_spec, wgt_spec, cvec_spec],
        out_specs=(x_spec, bvec_spec, bvec_spec),
        compiler_params=pltpu.CompilerParams(
            dimension_semantics=("parallel", "arbitrary"),
            vmem_limit_bytes=_vmem_limit(4 * tile_bytes + 4 * w_bytes)),
        cost_estimate=pl.CostEstimate(
            flops=4 * B * Lp * Cp * Cp,
            transcendentals=0,
            bytes_accessed=2 * B * Lp * Cp * 4 + 2 * w_bytes + 4 * B * Cp * 4),
    )(xp, w1p, b1p, scale1.reshape(Cp, 1), shift1.reshape(Cp, 1), w2p, b2p)

    sum2_b = s2[:, :, 0]                                     # (B, Cp): per-batch sum over L
    sum2 = jnp.sum(sum2_b, axis=0)
    sumsq2 = jnp.sum(q2[:, :, 0], axis=0)
    mu2 = sum2 / n
    var2 = jnp.maximum(sumsq2 / n - mu2 * mu2, 0.0)
    scale2 = g2p * jax.lax.rsqrt(var2 + _EPS)
    shift2 = be2p - mu2 * scale2

    # ---- tiny SE MLP, computed once outside the bandwidth-critical loops ---- #
    pooled = (sum2_b / jnp.float32(L)) * scale2 + shift2     # mean_L of bn2(h2), (B, Cp)
    hid = jnp.maximum(pooled[:, :C] @ fc1_w.astype(jnp.float32).T, 0.0)
    se = jax.nn.sigmoid(hid @ fc2_w.astype(jnp.float32).T)   # (B, C)
    if Cp != C:
        se = jnp.pad(se, ((0, 0), (0, Cp - C)))
    se = se.reshape(B, Cp, 1)

    # ------- pass 3: bn2 apply + SE scale + residual + final ReLU ------- #
    out_p = pl.pallas_call(
        _bn2_se_residual_kernel,
        out_shape=jax.ShapeDtypeStruct((B, Cp, Lp), jnp.float32),
        grid=grid,
        in_specs=[x_spec, x_spec, cvec_spec, cvec_spec, bvec_spec],
        out_specs=x_spec,
        compiler_params=pltpu.CompilerParams(
            dimension_semantics=("parallel", "parallel"),
            vmem_limit_bytes=_vmem_limit(6 * tile_bytes)),
        cost_estimate=pl.CostEstimate(
            flops=4 * B * Lp * Cp,
            transcendentals=0,
            bytes_accessed=3 * B * Lp * Cp * 4),
    )(xp, h2, scale2.reshape(Cp, 1), shift2.reshape(Cp, 1), se)

    if Cp != C or Lp != L:
        out_p = out_p[:, :C, :L]
    return out_p


def se_basic_block_ref(x, params):
    """Pure-JAX f32 reference implementing the same SEBasicBlock forward."""
    (w1, b1, g1, be1, w2, b2, g2, be2, fc1_w, fc2_w) = params

    def bn(h, g, be):
        mu = jnp.mean(h, axis=(0, 2), keepdims=True)
        var = jnp.mean((h - mu) ** 2, axis=(0, 2), keepdims=True)
        return (h - mu) * jax.lax.rsqrt(var + _EPS) * g[None, :, None] + be[None, :, None]

    h = jnp.einsum('oc,bcl->bol', w1, x) + b1[None, :, None]
    h = jnp.maximum(bn(h, g1, be1), 0.0)
    h = jnp.einsum('oc,bcl->bol', w2, h) + b2[None, :, None]
    h = bn(h, g2, be2)
    pooled = jnp.mean(h, axis=2)
    s = jax.nn.sigmoid(jnp.maximum(pooled @ fc1_w.T, 0.0) @ fc2_w.T)
    h = h * s[:, :, None]
    return jnp.maximum(h + x, 0.0)


def init_params(key, channels, reduction=16):
    """Deterministic synthetic parameters matching SEBasicBlock.__init__ shapes."""
    C = channels
    Cr = max(C // reduction, 1)
    ks = jax.random.split(key, 6)
    scale = 1.0 / jnp.sqrt(jnp.float32(C))
    # Conv1d weights are (C_out, C_in, 1) in PyTorch; pass them squeezed to (C_out, C_in).
    w1 = jax.random.normal(ks[0], (C, C), jnp.float32) * scale
    b1 = jax.random.normal(ks[1], (C,), jnp.float32) * scale
    w2 = jax.random.normal(ks[2], (C, C), jnp.float32) * scale
    b2 = jax.random.normal(ks[3], (C,), jnp.float32) * scale
    # BatchNorm1d default init: gamma=1, beta=0.
    g1 = jnp.ones((C,), jnp.float32)
    be1 = jnp.zeros((C,), jnp.float32)
    g2 = jnp.ones((C,), jnp.float32)
    be2 = jnp.zeros((C,), jnp.float32)
    # SE Linear weights (bias=False), PyTorch-native shapes: fc1 (Cr, C), fc2 (C, Cr).
    fc1_w = jax.random.normal(ks[4], (Cr, C), jnp.float32) * scale
    fc2_w = jax.random.normal(ks[5], (C, Cr), jnp.float32) / jnp.sqrt(jnp.float32(Cr))
    return (w1, b1, g1, be1, w2, b2, g2, be2, fc1_w, fc2_w)


if __name__ == "__main__":
    B, C, L = 2, 32, 16          # reduction=16 -> SE hidden dim = 2
    reduction = 16
    key = jax.random.PRNGKey(0)
    kx, kp = jax.random.split(key)
    x = jax.random.normal(kx, (B, C, L), jnp.float32)
    params = init_params(kp, C, reduction=reduction)

    y = se_basic_block(x, params)
    y = jax.block_until_ready(y)

    assert y.shape == (B, C, L)
    assert bool(jnp.all(jnp.isfinite(y)))
    assert bool(jnp.all(y >= 0.0))           # final ReLU

    y_ref = se_basic_block_ref(x, params)    # pure-JAX f32 reference
    max_err = float(jnp.max(jnp.abs(y - y_ref)))
    assert max_err < 1e-1, f"mismatch vs reference: max_abs_err={max_err}"
    print("KERNEL_OK")
</pallas_src>

<mosaic_0001>
module attributes {stable_mosaic.version = 11 : i64} {
  func.func @_conv1_stats_kernel(%arg0: i32, %arg1: i32, %arg2: memref<1x32x128xf32, #tpu.memory_space<vmem>>, %arg3: memref<32x32xbf16, #tpu.memory_space<vmem>>, %arg4: memref<32x1xf32, #tpu.memory_space<vmem>>, %arg5: memref<1x32x1xf32, #tpu.memory_space<vmem>>, %arg6: memref<1x32x1xf32, #tpu.memory_space<vmem>>) attributes {dimension_semantics = [#tpu.dimension_semantics<parallel>, #tpu.dimension_semantics<arbitrary>], iteration_bounds = array<i64: 2, 1>, scalar_prefetch = 0 : i64, scratch_operands = 0 : i64, tpu.core_type = #tpu.core_type<tc>, window_params = [{transform_indices = @transform_0, window_bounds = array<i64: 1, 32, 128>}, {pipeline_mode = #tpu.pipeline_mode<synchronous>, transform_indices = @transform_1, window_bounds = array<i64: 32, 32>}, {pipeline_mode = #tpu.pipeline_mode<synchronous>, transform_indices = @transform_2, window_bounds = array<i64: 32, 1>}, {transform_indices = @transform_3, window_bounds = array<i64: 1, 32, 1>}, {transform_indices = @transform_4, window_bounds = array<i64: 1, 32, 1>}]} {
    %c0_i32 = arith.constant 0 : i32
    %0 = arith.cmpi eq, %arg1, %c0_i32 : i32
    %1 = arith.extui %0 : i1 to i32
    %c0_i32_0 = arith.constant 0 : i32
    %2 = arith.cmpi ne, %1, %c0_i32_0 : i32
    scf.if %2 {
      %cst_21 = arith.constant 0.000000e+00 : f32
      %38 = vector.broadcast %cst_21 : f32 to vector<1x32x1xf32>
      %c0_22 = arith.constant 0 : index
      %c0_23 = arith.constant 0 : index
      %c0_24 = arith.constant 0 : index
      %39 = vector.load %arg5[%c0_22, %c0_23, %c0_24] : memref<1x32x1xf32, #tpu.memory_space<vmem>>, vector<1x32x1xf32>
      tpu.vector_store %arg5[%c0_22, %c0_23, %c0_24], %38 {strides = array<i32>} : memref<1x32x1xf32, #tpu.memory_space<vmem>>, vector<1x32x1xf32>,
      %cst_25 = arith.constant 0.000000e+00 : f32
      %40 = vector.broadcast %cst_25 : f32 to vector<1x32x1xf32>
      %c0_26 = arith.constant 0 : index
      %c0_27 = arith.constant 0 : index
      %c0_28 = arith.constant 0 : index
      %41 = vector.load %arg6[%c0_26, %c0_27, %c0_28] : memref<1x32x1xf32, #tpu.memory_space<vmem>>, vector<1x32x1xf32>
      tpu.vector_store %arg6[%c0_26, %c0_27, %c0_28], %40 {strides = array<i32>} : memref<1x32x1xf32, #tpu.memory_space<vmem>>, vector<1x32x1xf32>,
    } else {
    }
    %c0 = arith.constant 0 : index
    %c0_1 = arith.constant 0 : index
    %c0_2 = arith.constant 0 : index
    %3 = vector.load %arg2[%c0, %c0_1, %c0_2] : memref<1x32x128xf32, #tpu.memory_space<vmem>>, vector<1x32x128xf32>
    %4 = vector.shape_cast %3 : vector<1x32x128xf32> to vector<32x128xf32>
    %5 = arith.truncf %4 : vector<32x128xf32> to vector<32x128xbf16>
    %c0_3 = arith.constant 0 : index
    %c0_4 = arith.constant 0 : index
    %6 = vector.load %arg3[%c0_3, %c0_4] : memref<32x32xbf16, #tpu.memory_space<vmem>>, vector<32x32xbf16>
    %cst = arith.constant dense<0.000000e+00> : vector<32x128xf32>
    %7 = tpu.matmul %6, %5, %cst {dimension_numbers = #tpu.dot_dimension_numbers<[1], [0], [0], [1], [0, 0, 1, 1], [], []>} : vector<32x32xbf16>, vector<32x128xbf16>, vector<32x128xf32> -> vector<32x128xf32>
    %c0_5 = arith.constant 0 : index
    %c0_6 = arith.constant 0 : index
    %8 = vector.load %arg4[%c0_5, %c0_6] : memref<32x1xf32, #tpu.memory_space<vmem>>, vector<32x1xf32>
    %9 = vector.broadcast %8 : vector<32x1xf32> to vector<32x128xf32>
    %10 = arith.addf %7, %9 : vector<32x128xf32>
    %c128_i32 = arith.constant 128 : i32
    %11 = arith.muli %arg1, %c128_i32 : i32
    %12 = tpu.iota {dimensions = array<i32: 1>} : vector<1x128xi32>
    %13 = vector.broadcast %11 : i32 to vector<1x128xi32>
    %14 = arith.addi %13, %12 : vector<1x128xi32>
    %c16_i32 = arith.constant 16 : i32
    %15 = vector.broadcast %c16_i32 : i32 to vector<1x128xi32>
    %16 = arith.cmpi slt, %14, %15 : vector<1x128xi32>
    %17 = arith.extui %16 : vector<1x128xi1> to vector<1x128xi32>
    %18 = arith.sitofp %17 : vector<1x128xi32> to vector<1x128xf32>
    %19 = vector.broadcast %18 : vector<1x128xf32> to vector<32x128xf32>
    %20 = arith.mulf %10, %19 : vector<32x128xf32>
    %c0_7 = arith.constant 0 : index
    %c0_8 = arith.constant 0 : index
    %c0_9 = arith.constant 0 : index
    %21 = vector.load %arg5[%c0_7, %c0_8, %c0_9] : memref<1x32x1xf32, #tpu.memory_space<vmem>>, vector<1x32x1xf32>
    %22 = vector.shape_cast %21 : vector<1x32x1xf32> to vector<32x1xf32>
    %cst_10 = arith.constant dense<0.000000e+00> : vector<32xf32>
    %23 = vector.multi_reduction <add>, %20, %cst_10 [1] : vector<32x128xf32> to vector<32xf32>
    %24 = vector.shape_cast %23 : vector<32xf32> to vector<32x1xf32>
    %25 = arith.addf %22, %24 : vector<32x1xf32>
    %c0_11 = arith.constant 0 : index
    %c0_12 = arith.constant 0 : index
    %c0_13 = arith.constant 0 : index
    %26 = vector.load %arg5[%c0_11, %c0_12, %c0_13] : memref<1x32x1xf32, #tpu.memory_space<vmem>>, vector<1x32x1xf32>
    %27 = vector.shape_cast %26 : vector<1x32x1xf32> to vector<32x1xf32>
    %28 = vector.shape_cast %25 : vector<32x1xf32> to vector<1x32x1xf32>
    tpu.vector_store %arg5[%c0_11, %c0_12, %c0_13], %28 {strides = array<i32>} : memref<1x32x1xf32, #tpu.memory_space<vmem>>, vector<1x32x1xf32>,
    %c0_14 = arith.constant 0 : index
    %c0_15 = arith.constant 0 : index
    %c0_16 = arith.constant 0 : index
    %29 = vector.load %arg6[%c0_14, %c0_15, %c0_16] : memref<1x32x1xf32, #tpu.memory_space<vmem>>, vector<1x32x1xf32>
    %30 = vector.shape_cast %29 : vector<1x32x1xf32> to vector<32x1xf32>
    %31 = arith.mulf %20, %20 : vector<32x128xf32>
    %cst_17 = arith.constant dense<0.000000e+00> : vector<32xf32>
    %32 = vector.multi_reduction <add>, %31, %cst_17 [1] : vector<32x128xf32> to vector<32xf32>
    %33 = vector.shape_cast %32 : vector<32xf32> to vector<32x1xf32>
    %34 = arith.addf %30, %33 : vector<32x1xf32>
    %c0_18 = arith.constant 0 : index
    %c0_19 = arith.constant 0 : index
    %c0_20 = arith.constant 0 : index
    %35 = vector.load %arg6[%c0_18, %c0_19, %c0_20] : memref<1x32x1xf32, #tpu.memory_space<vmem>>, vector<1x32x1xf32>
    %36 = vector.shape_cast %35 : vector<1x32x1xf32> to vector<32x1xf32>
    %37 = vector.shape_cast %34 : vector<32x1xf32> to vector<1x32x1xf32>
    tpu.vector_store %arg6[%c0_18, %c0_19, %c0_20], %37 {strides = array<i32>} : memref<1x32x1xf32, #tpu.memory_space<vmem>>, vector<1x32x1xf32>,
    return
  }
  func.func @transform_0(%arg0: i32, %arg1: i32) -> (i32, i32, i32) {
    %c0_i32 = arith.constant 0 : i32
    %c0_i32_0 = arith.constant 0 : i32
    return %arg0, %c0_i32, %arg1 : i32, i32, i32
  }
  func.func @transform_1(%arg0: i32, %arg1: i32) -> (i32, i32) {
    %c0_i32 = arith.constant 0 : i32
    %c0_i32_0 = arith.constant 0 : i32
    %c0_i32_1 = arith.constant 0 : i32
    return %c0_i32, %c0_i32_0 : i32, i32
  }
  func.func @transform_2(%arg0: i32, %arg1: i32) -> (i32, i32) {
    %c0_i32 = arith.constant 0 : i32
    %c0_i32_0 = arith.constant 0 : i32
    %c0_i32_1 = arith.constant 0 : i32
    return %c0_i32, %c0_i32_0 : i32, i32
  }
  func.func @transform_3(%arg0: i32, %arg1: i32) -> (i32, i32, i32) {
    %c0_i32 = arith.constant 0 : i32
    %c0_i32_0 = arith.constant 0 : i32
    %c0_i32_1 = arith.constant 0 : i32
    return %arg0, %c0_i32, %c0_i32_0 : i32, i32, i32
  }
  func.func @transform_4(%arg0: i32, %arg1: i32) -> (i32, i32, i32) {
    %c0_i32 = arith.constant 0 : i32
    %c0_i32_0 = arith.constant 0 : i32
    %c0_i32_1 = arith.constant 0 : i32
    return %arg0, %c0_i32, %c0_i32_0 : i32, i32, i32
  }
}

module attributes {stable_mosaic.version = 11 : i64} {
  func.func @_conv_chain_kernel(%arg0: i32, %arg1: i32, %arg2: memref<1x32x128xf32, #tpu.memory_space<vmem>>, %arg3: memref<32x32xbf16, #tpu.memory_space<vmem>>, %arg4: memref<32x1xf32, #tpu.memory_space<vmem>>, %arg5: memref<32x1xf32, #tpu.memory_space<vmem>>, %arg6: memref<32x1xf32, #tpu.memory_space<vmem>>, %arg7: memref<32x32xbf16, #tpu.memory_space<vmem>>, %arg8: memref<32x1xf32, #tpu.memory_space<vmem>>, %arg9: memref<1x32x128xf32, #tpu.memory_space<vmem>>, %arg10: memref<1x32x1xf32, #tpu.memory_space<vmem>>, %arg11: memref<1x32x1xf32, #tpu.memory_space<vmem>>) attributes {dimension_semantics = [#tpu.dimension_semantics<parallel>, #tpu.dimension_semantics<arbitrary>], iteration_bounds = array<i64: 2, 1>, scalar_prefetch = 0 : i64, scratch_operands = 0 : i64, tpu.core_type = #tpu.core_type<tc>, window_params = [{transform_indices = @transform_0, window_bounds = array<i64: 1, 32, 128>}, {pipeline_mode = #tpu.pipeline_mode<synchronous>, transform_indices = @transform_1, window_bounds = array<i64: 32, 32>}, {pipeline_mode = #tpu.pipeline_mode<synchronous>, transform_indices = @transform_2, window_bounds = array<i64: 32, 1>}, {pipeline_mode = #tpu.pipeline_mode<synchronous>, transform_indices = @transform_3, window_bounds = array<i64: 32, 1>}, {pipeline_mode = #tpu.pipeline_mode<synchronous>, transform_indices = @transform_4, window_bounds = array<i64: 32, 1>}, {pipeline_mode = #tpu.pipeline_mode<synchronous>, transform_indices = @transform_5, window_bounds = array<i64: 32, 32>}, {pipeline_mode = #tpu.pipeline_mode<synchronous>, transform_indices = @transform_6, window_bounds = array<i64: 32, 1>}, {transform_indices = @transform_7, window_bounds = array<i64: 1, 32, 128>}, {transform_indices = @transform_8, window_bounds = array<i64: 1, 32, 1>}, {transform_indices = @transform_9, window_bounds = array<i64: 1, 32, 1>}]} {
    %c0_i32 = arith.constant 0 : i32
    %0 = arith.cmpi eq, %arg1, %c0_i32 : i32
    %1 = arith.extui %0 : i1 to i32
    %c0_i32_0 = arith.constant 0 : i32
    %2 = arith.cmpi ne, %1, %c0_i32_0 : i32
    scf.if %2 {
      %cst_34 = arith.constant 0.000000e+00 : f32
      %55 = vector.broadcast %cst_34 : f32 to vector<1x32x1xf32>
      %c0_35 = arith.constant 0 : index
      %c0_36 = arith.constant 0 : index
      %c0_37 = arith.constant 0 : index
      %56 = vector.load %arg10[%c0_35, %c0_36, %c0_37] : memref<1x32x1xf32, #tpu.memory_space<vmem>>, vector<1x32x1xf32>
      tpu.vector_store %arg10[%c0_35, %c0_36, %c0_37], %55 {strides = array<i32>} : memref<1x32x1xf32, #tpu.memory_space<vmem>>, vector<1x32x1xf32>,
      %cst_38 = arith.constant 0.000000e+00 : f32
      %57 = vector.broadcast %cst_38 : f32 to vector<1x32x1xf32>
      %c0_39 = arith.constant 0 : index
      %c0_40 = arith.constant 0 : index
      %c0_41 = arith.constant 0 : index
      %58 = vector.load %arg11[%c0_39, %c0_40, %c0_41] : memref<1x32x1xf32, #tpu.memory_space<vmem>>, vector<1x32x1xf32>
      tpu.vector_store %arg11[%c0_39, %c0_40, %c0_41], %57 {strides = array<i32>} : memref<1x32x1xf32, #tpu.memory_space<vmem>>, vector<1x32x1xf32>,
    } else {
    }
    %c0 = arith.constant 0 : index
    %c0_1 = arith.constant 0 : index
    %c0_2 = arith.constant 0 : index
    %3 = vector.load %arg2[%c0, %c0_1, %c0_2] : memref<1x32x128xf32, #tpu.memory_space<vmem>>, vector<1x32x128xf32>
    %4 = vector.shape_cast %3 : vector<1x32x128xf32> to vector<32x128xf32>
    %5 = arith.truncf %4 : vector<32x128xf32> to vector<32x128xbf16>
    %c0_3 = arith.constant 0 : index
    %c0_4 = arith.constant 0 : index
    %6 = vector.load %arg3[%c0_3, %c0_4] : memref<32x32xbf16, #tpu.memory_space<vmem>>, vector<32x32xbf16>
    %cst = arith.constant dense<0.000000e+00> : vector<32x128xf32>
    %7 = tpu.matmul %6, %5, %cst {dimension_numbers = #tpu.dot_dimension_numbers<[1], [0], [0], [1], [0, 0, 1, 1], [], []>} : vector<32x32xbf16>, vector<32x128xbf16>, vector<32x128xf32> -> vector<32x128xf32>
    %c0_5 = arith.constant 0 : index
    %c0_6 = arith.constant 0 : index
    %8 = vector.load %arg4[%c0_5, %c0_6] : memref<32x1xf32, #tpu.memory_space<vmem>>, vector<32x1xf32>
    %9 = vector.broadcast %8 : vector<32x1xf32> to vector<32x128xf32>
    %10 = arith.addf %7, %9 : vector<32x128xf32>
    %c0_7 = arith.constant 0 : index
    %c0_8 = arith.constant 0 : index
    %11 = vector.load %arg5[%c0_7, %c0_8] : memref<32x1xf32, #tpu.memory_space<vmem>>, vector<32x1xf32>
    %12 = vector.broadcast %11 : vector<32x1xf32> to vector<32x128xf32>
    %13 = arith.mulf %10, %12 : vector<32x128xf32>
    %c0_9 = arith.constant 0 : index
    %c0_10 = arith.constant 0 : index
    %14 = vector.load %arg6[%c0_9, %c0_10] : memref<32x1xf32, #tpu.memory_space<vmem>>, vector<32x1xf32>
    %15 = vector.broadcast %14 : vector<32x1xf32> to vector<32x128xf32>
    %16 = arith.addf %13, %15 : vector<32x128xf32>
    %cst_11 = arith.constant 0.000000e+00 : f32
    %17 = vector.broadcast %cst_11 : f32 to vector<32x128xf32>
    %18 = arith.maximumf %16, %17 : vector<32x128xf32>
    %c0_12 = arith.constant 0 : index
    %c0_13 = arith.constant 0 : index
    %19 = vector.load %arg7[%c0_12, %c0_13] : memref<32x32xbf16, #tpu.memory_space<vmem>>, vector<32x32xbf16>
    %20 = arith.truncf %18 : vector<32x128xf32> to vector<32x128xbf16>
    %cst_14 = arith.constant dense<0.000000e+00> : vector<32x128xf32>
    %21 = tpu.matmul %19, %20, %cst_14 {dimension_numbers = #tpu.dot_dimension_numbers<[1], [0], [0], [1], [0, 0, 1, 1], [], []>} : vector<32x32xbf16>, vector<32x128xbf16>, vector<32x128xf32> -> vector<32x128xf32>
    %c0_15 = arith.constant 0 : index
    %c0_16 = arith.constant 0 : index
    %22 = vector.load %arg8[%c0_15, %c0_16] : memref<32x1xf32, #tpu.memory_space<vmem>>, vector<32x1xf32>
    %23 = vector.broadcast %22 : vector<32x1xf32> to vector<32x128xf32>
    %24 = arith.addf %21, %23 : vector<32x128xf32>
    %c0_17 = arith.constant 0 : index
    %c0_18 = arith.constant 0 : index
    %c0_19 = arith.constant 0 : index
    %25 = vector.load %arg9[%c0_17, %c0_18, %c0_19] : memref<1x32x128xf32, #tpu.memory_space<vmem>>, vector<1x32x128xf32>
    %26 = vector.shape_cast %25 : vector<1x32x128xf32> to vector<32x128xf32>
    %27 = vector.shape_cast %24 : vector<32x128xf32> to vector<1x32x128xf32>
    tpu.vector_store %arg9[%c0_17, %c0_18, %c0_19], %27 {strides = array<i32>} : memref<1x32x128xf32, #tpu.memory_space<vmem>>, vector<1x32x128xf32>,
    %c128_i32 = arith.constant 128 : i32
    %28 = arith.muli %arg1, %c128_i32 : i32
    %29 = tpu.iota {dimensions = array<i32: 1>} : vector<1x128xi32>
    %30 = vector.broadcast %28 : i32 to vector<1x128xi32>
    %31 = arith.addi %30, %29 : vector<1x128xi32>
    %c16_i32 = arith.constant 16 : i32
    %32 = vector.broadcast %c16_i32 : i32 to vector<1x128xi32>
    %33 = arith.cmpi slt, %31, %32 : vector<1x128xi32>
    %34 = arith.extui %33 : vector<1x128xi1> to vector<1x128xi32>
    %35 = arith.sitofp %34 : vector<1x128xi32> to vector<1x128xf32>
    %36 = vector.broadcast %35 : vector<1x128xf32> to vector<32x128xf32>
    %37 = arith.mulf %24, %36 : vector<32x128xf32>
    %c0_20 = arith.constant 0 : index
    %c0_21 = arith.constant 0 : index
    %c0_22 = arith.constant 0 : index
    %38 = vector.load %arg10[%c0_20, %c0_21, %c0_22] : memref<1x32x1xf32, #tpu.memory_space<vmem>>, vector<1x32x1xf32>
    %39 = vector.shape_cast %38 : vector<1x32x1xf32> to vector<32x1xf32>
    %cst_23 = arith.constant dense<0.000000e+00> : vector<32xf32>
    %40 = vector.multi_reduction <add>, %37, %cst_23 [1] : vector<32x128xf32> to vector<32xf32>
    %41 = vector.shape_cast %40 : vector<32xf32> to vector<32x1xf32>
    %42 = arith.addf %39, %41 : vector<32x1xf32>
    %c0_24 = arith.constant 0 : index
    %c0_25 = arith.constant 0 : index
    %c0_26 = arith.constant 0 : index
    %43 = vector.load %arg10[%c0_24, %c0_25, %c0_26] : memref<1x32x1xf32, #tpu.memory_space<vmem>>, vector<1x32x1xf32>
    %44 = vector.shape_cast %43 : vector<1x32x1xf32> to vector<32x1xf32>
    %45 = vector.shape_cast %42 : vector<32x1xf32> to vector<1x32x1xf32>
    tpu.vector_store %arg10[%c0_24, %c0_25, %c0_26], %45 {strides = array<i32>} : memref<1x32x1xf32, #tpu.memory_space<vmem>>, vector<1x32x1xf32>,
    %c0_27 = arith.constant 0 : index
    %c0_28 = arith.constant 0 : index
    %c0_29 = arith.constant 0 : index
    %46 = vector.load %arg11[%c0_27, %c0_28, %c0_29] : memref<1x32x1xf32, #tpu.memory_space<vmem>>, vector<1x32x1xf32>
    %47 = vector.shape_cast %46 : vector<1x32x1xf32> to vector<32x1xf32>
    %48 = arith.mulf %37, %37 : vector<32x128xf32>
    %cst_30 = arith.constant dense<0.000000e+00> : vector<32xf32>
    %49 = vector.multi_reduction <add>, %48, %cst_30 [1] : vector<32x128xf32> to vector<32xf32>
    %50 = vector.shape_cast %49 : vector<32xf32> to vector<32x1xf32>
    %51 = arith.addf %47, %50 : vector<32x1xf32>
    %c0_31 = arith.constant 0 : index
    %c0_32 = arith.constant 0 : index
    %c0_33 = arith.constant 0 : index
    %52 = vector.load %arg11[%c0_31, %c0_32, %c0_33] : memref<1x32x1xf32, #tpu.memory_space<vmem>>, vector<1x32x1xf32>
    %53 = vector.shape_cast %52 : vector<1x32x1xf32> to vector<32x1xf32>
    %54 = vector.shape_cast %51 : vector<32x1xf32> to vector<1x32x1xf32>
    tpu.vector_store %arg11[%c0_31, %c0_32, %c0_33], %54 {strides = array<i32>} : memref<1x32x1xf32, #tpu.memory_space<vmem>>, vector<1x32x1xf32>,
    return
  }
  func.func @transform_0(%arg0: i32, %arg1: i32) -> (i32, i32, i32) {
    %c0_i32 = arith.constant 0 : i32
    %c0_i32_0 = arith.constant 0 : i32
    return %arg0, %c0_i32, %arg1 : i32, i32, i32
  }
  func.func @transform_1(%arg0: i32, %arg1: i32) -> (i32, i32) {
    %c0_i32 = arith.constant 0 : i32
    %c0_i32_0 = arith.constant 0 : i32
    %c0_i32_1 = arith.constant 0 : i32
    return %c0_i32, %c0_i32_0 : i32, i32
  }
  func.func @transform_2(%arg0: i32, %arg1: i32) -> (i32, i32) {
    %c0_i32 = arith.constant 0 : i32
    %c0_i32_0 = arith.constant 0 : i32
    %c0_i32_1 = arith.constant 0 : i32
    return %c0_i32, %c0_i32_0 : i32, i32
  }
  func.func @transform_3(%arg0: i32, %arg1: i32) -> (i32, i32) {
    %c0_i32 = arith.constant 0 : i32
    %c0_i32_0 = arith.constant 0 : i32
    %c0_i32_1 = arith.constant 0 : i32
    return %c0_i32, %c0_i32_0 : i32, i32
  }
  func.func @transform_4(%arg0: i32, %arg1: i32) -> (i32, i32) {
    %c0_i32 = arith.constant 0 : i32
    %c0_i32_0 = arith.constant 0 : i32
    %c0_i32_1 = arith.constant 0 : i32
    return %c0_i32, %c0_i32_0 : i32, i32
  }
  func.func @transform_5(%arg0: i32, %arg1: i32) -> (i32, i32) {
    %c0_i32 = arith.constant 0 : i32
    %c0_i32_0 = arith.constant 0 : i32
    %c0_i32_1 = arith.constant 0 : i32
    return %c0_i32, %c0_i32_0 : i32, i32
  }
  func.func @transform_6(%arg0: i32, %arg1: i32) -> (i32, i32) {
    %c0_i32 = arith.constant 0 : i32
    %c0_i32_0 = arith.constant 0 : i32
    %c0_i32_1 = arith.constant 0 : i32
    return %c0_i32, %c0_i32_0 : i32, i32
  }
  func.func @transform_7(%arg0: i32, %arg1: i32) -> (i32, i32, i32) {
    %c0_i32 = arith.constant 0 : i32
    %c0_i32_0 = arith.constant 0 : i32
    return %arg0, %c0_i32, %arg1 : i32, i32, i32
  }
  func.func @transform_8(%arg0: i32, %arg1: i32) -> (i32, i32, i32) {
    %c0_i32 = arith.constant 0 : i32
    %c0_i32_0 = arith.constant 0 : i32
    %c0_i32_1 = arith.constant 0 : i32
    return %arg0, %c0_i32, %c0_i32_0 : i32, i32, i32
  }
  func.func @transform_9(%arg0: i32, %arg1: i32) -> (i32, i32, i32) {
    %c0_i32 = arith.constant 0 : i32
    %c0_i32_0 = arith.constant 0 : i32
    %c0_i32_1 = arith.constant 0 : i32
    return %arg0, %c0_i32, %c0_i32_0 : i32, i32, i32
  }
}

module attributes {stable_mosaic.version = 11 : i64} {
  func.func @_bn2_se_residual_kernel(%arg0: i32, %arg1: i32, %arg2: memref<1x32x128xf32, #tpu.memory_space<vmem>>, %arg3: memref<1x32x128xf32, #tpu.memory_space<vmem>>, %arg4: memref<32x1xf32, #tpu.memory_space<vmem>>, %arg5: memref<32x1xf32, #tpu.memory_space<vmem>>, %arg6: memref<1x32x1xf32, #tpu.memory_space<vmem>>, %arg7: memref<1x32x128xf32, #tpu.memory_space<vmem>>) attributes {dimension_semantics = [#tpu.dimension_semantics<parallel>, #tpu.dimension_semantics<parallel>], iteration_bounds = array<i64: 2, 1>, scalar_prefetch = 0 : i64, scratch_operands = 0 : i64, tpu.core_type = #tpu.core_type<tc>, window_params = [{transform_indices = @transform_0, window_bounds = array<i64: 1, 32, 128>}, {transform_indices = @transform_1, window_bounds = array<i64: 1, 32, 128>}, {pipeline_mode = #tpu.pipeline_mode<synchronous>, transform_indices = @transform_2, window_bounds = array<i64: 32, 1>}, {pipeline_mode = #tpu.pipeline_mode<synchronous>, transform_indices = @transform_3, window_bounds = array<i64: 32, 1>}, {transform_indices = @transform_4, window_bounds = array<i64: 1, 32, 1>}, {transform_indices = @transform_5, window_bounds = array<i64: 1, 32, 128>}]} {
    %c0 = arith.constant 0 : index
    %c0_0 = arith.constant 0 : index
    %c0_1 = arith.constant 0 : index
    %0 = vector.load %arg3[%c0, %c0_0, %c0_1] : memref<1x32x128xf32, #tpu.memory_space<vmem>>, vector<1x32x128xf32>
    %1 = vector.shape_cast %0 : vector<1x32x128xf32> to vector<32x128xf32>
    %c0_2 = arith.constant 0 : index
    %c0_3 = arith.constant 0 : index
    %2 = vector.load %arg4[%c0_2, %c0_3] : memref<32x1xf32, #tpu.memory_space<vmem>>, vector<32x1xf32>
    %3 = vector.broadcast %2 : vector<32x1xf32> to vector<32x128xf32>
    %4 = arith.mulf %1, %3 : vector<32x128xf32>
    %c0_4 = arith.constant 0 : index
    %c0_5 = arith.constant 0 : index
    %5 = vector.load %arg5[%c0_4, %c0_5] : memref<32x1xf32, #tpu.memory_space<vmem>>, vector<32x1xf32>
    %6 = vector.broadcast %5 : vector<32x1xf32> to vector<32x128xf32>
    %7 = arith.addf %4, %6 : vector<32x128xf32>
    %c0_6 = arith.constant 0 : index
    %c0_7 = arith.constant 0 : index
    %c0_8 = arith.constant 0 : index
    %8 = vector.load %arg6[%c0_6, %c0_7, %c0_8] : memref<1x32x1xf32, #tpu.memory_space<vmem>>, vector<1x32x1xf32>
    %9 = vector.shape_cast %8 : vector<1x32x1xf32> to vector<32x1xf32>
    %10 = vector.broadcast %9 : vector<32x1xf32> to vector<32x128xf32>
    %11 = arith.mulf %7, %10 : vector<32x128xf32>
    %c0_9 = arith.constant 0 : index
    %c0_10 = arith.constant 0 : index
    %c0_11 = arith.constant 0 : index
    %12 = vector.load %arg2[%c0_9, %c0_10, %c0_11] : memref<1x32x128xf32, #tpu.memory_space<vmem>>, vector<1x32x128xf32>
    %13 = vector.shape_cast %12 : vector<1x32x128xf32> to vector<32x128xf32>
    %14 = arith.addf %11, %13 : vector<32x128xf32>
    %cst = arith.constant 0.000000e+00 : f32
    %15 = vector.broadcast %cst : f32 to vector<32x128xf32>
    %16 = arith.maximumf %14, %15 : vector<32x128xf32>
    %c0_12 = arith.constant 0 : index
    %c0_13 = arith.constant 0 : index
    %c0_14 = arith.constant 0 : index
    %17 = vector.load %arg7[%c0_12, %c0_13, %c0_14] : memref<1x32x128xf32, #tpu.memory_space<vmem>>, vector<1x32x128xf32>
    %18 = vector.shape_cast %17 : vector<1x32x128xf32> to vector<32x128xf32>
    %19 = vector.shape_cast %16 : vector<32x128xf32> to vector<1x32x128xf32>
    tpu.vector_store %arg7[%c0_12, %c0_13, %c0_14], %19 {strides = array<i32>} : memref<1x32x128xf32, #tpu.memory_space<vmem>>, vector<1x32x128xf32>,
    return
  }
  func.func @transform_0(%arg0: i32, %arg1: i32) -> (i32, i32, i32) {
    %c0_i32 = arith.constant 0 : i32
    %c0_i32_0 = arith.constant 0 : i32
    return %arg0, %c0_i32, %arg1 : i32, i32, i32
  }
  func.func @transform_1(%arg0: i32, %arg1: i32) -> (i32, i32, i32) {
    %c0_i32 = arith.constant 0 : i32
    %c0_i32_0 = arith.constant 0 : i32
    return %arg0, %c0_i32, %arg1 : i32, i32, i32
  }
  func.func @transform_2(%arg0: i32, %arg1: i32) -> (i32, i32) {
    %c0_i32 = arith.constant 0 : i32
    %c0_i32_0 = arith.constant 0 : i32
    %c0_i32_1 = arith.constant 0 : i32
    return %c0_i32, %c0_i32_0 : i32, i32
  }
  func.func @transform_3(%arg0: i32, %arg1: i32) -> (i32, i32) {
    %c0_i32 = arith.constant 0 : i32
    %c0_i32_0 = arith.constant 0 : i32
    %c0_i32_1 = arith.constant 0 : i32
    return %c0_i32, %c0_i32_0 : i32, i32
  }
  func.func @transform_4(%arg0: i32, %arg1: i32) -> (i32, i32, i32) {
    %c0_i32 = arith.constant 0 : i32
    %c0_i32_0 = arith.constant 0 : i32
    %c0_i32_1 = arith.constant 0 : i32
    return %arg0, %c0_i32, %c0_i32_0 : i32, i32, i32
  }
  func.func @transform_5(%arg0: i32, %arg1: i32) -> (i32, i32, i32) {
    %c0_i32 = arith.constant 0 : i32
    %c0_i32_0 = arith.constant 0 : i32
    return %arg0, %c0_i32, %arg1 : i32, i32, i32
  }
}

</mosaic_0001>

<llo_original>
// kernel: se_basic_block.3
$region0: #{se_basic_block.3}
  #allocation0 [shape = 'u32[]', space=smem, size = 0x4, offset = 0x4, fixed_abs, tag = 'smem constant byte address 0x4 - core index']
  #allocation1 [shape = 'u32[144,128]{1,0:T(1,128)}', space=vmem, size = 0x12000, scoped, tag = 'internal scratch']
  %s0 = inlined_call_operand.vmem [shape: f32[2,32,128], index: 0, kind: input, shape index: {}]
  %s1 = inlined_call_operand.vmem [shape: bf16[32,32], index: 1, kind: input, shape index: {}]
  %s2 = inlined_call_operand.vmem [shape: f32[32,1], index: 2, kind: input, shape index: {}]
  %s3 = inlined_call_operand.vmem [shape: f32[2,32,1], index: 3, kind: output, shape index: {0}]
  %s4 = inlined_call_operand.vmem [shape: f32[2,32,1], index: 4, kind: output, shape index: {1}]
  %5 = xla_tuple %s3, %s4
  %s6 = sld [smem:[#allocation0]]
  $region57: #{se_basic_block.3} parent=0
    _
  %s8 = ssub.s32 1, %s6
  %s9 = scalar_select 0, %s8, %s6
  loop: start=0, step=1, limit=4
  $region2: #{se_basic_block.3} parent=0 // loop_pre_header
    _
  $region3: #{se_basic_block.3} parent=0 // loop_header
    %s11 = sphi 0, %s15
    %p12 = scmp.ge.s32.totalorder %s11, 4
    %s18 = sphi 0, %s30
    %s19 = sphi 0, %s26
    %s20 = sphi 0, %s18
    %s21 = sphi 0, %s19
    %s22 = sphi 0, %s20
    %s23 = sphi 0, %s21
    %s35 = sphi 0, %s37
    %s38 = sphi 0, %s35
    %s39 = sphi 0, %s38
    %s55 = sphi 0, %s39
    %s59 = sphi 0, %s59
    %s61 = sphi 0, %s59
    %s62 = sphi 0, %s61
    %s76 = sphi 0, %s62
    %s80 = sphi 0, %s80
    %s82 = sphi 0, %s80
    %s83 = sphi 0, %s82
    %s97 = sphi 0, %s83
    %s103 = sphi 0, %s105
    %s106 = sphi 0, %s103
    %s107 = sphi 0, %s106
    %s123 = sphi 0, %s107
    %s129 = sphi 0, %s131
    %s132 = sphi 0, %s129
    %s133 = sphi 0, %s132
    %s149 = sphi 0, %s133
  $region4: #{se_basic_block.3} parent=0 // loop_header_branch
    %14 = sbr.rel (%p12) target = $region8
  $region5: #{se_basic_block.3} parent=0 // loop_body
    %s16 = ssub.s32 %s11, 1
    %s17 = ssub.s32 %s11, 2
    %s24 = sadd.s32 1, %s19
    %p25 = scmp.ge.s32.totalorder %s24, 1
    %s26 = scalar_select %p25, 0, %s24
    %s27 = sadd.s32 1, %s18
    %s28 = scalar_select %p25, %s27, %s18
    %p29 = scmp.ge.s32.totalorder %s28, 2
    %s30 = scalar_select %p29, 0, %s28
    %s31 = ssub.s32 %s18, %s30
    %s32 = ssub.s32 %s19, %s26
    %s33 = sor.u32 %s31, %s32
    %p34 = scmp.eq.s32.totalorder %s33, 0
    %s36 = sadd.s32 %s35, 1
    %s37 = scalar_select %p34, %s35, %s36
    %p40 = pneg %p34
    %p41 = scmp.eq.s32.totalorder %s11, 1
    %p42 = por %p40, %p41
    %p43 = scmp.ne.s32.totalorder %s35, %s38
    %p44 = scmp.eq.s32.totalorder %s11, 0
    %p45 = por %p43, %p44
    %p46 = scmp.ne.s32.totalorder %s35, %s38
    %p47 = scmp.eq.s32.totalorder %s16, 1
    %p48 = por %p46, %p47
    %p49 = scmp.ne.s32.totalorder %s38, %s39
    %p50 = scmp.eq.s32.totalorder %s16, 0
    %p51 = por %p49, %p50
    %p52 = scmp.ne.s32.totalorder %s38, %s39
    %p53 = scmp.eq.s32.totalorder %s17, 1
    %p54 = por %p52, %p53
    %p56 = scmp.ne.s32.totalorder %s39, %s55
    %p57 = scmp.eq.s32.totalorder %s17, 0
    %p58 = por %p56, %p57
    %s60 = sadd.s32 %s59, 1
    %p63 = scmp.eq.s32.totalorder %s11, 1
    %p64 = scmp.ne.s32.totalorder %s59, %s61
    %p65 = scmp.eq.s32.totalorder %s11, 0
    %p66 = por %p64, %p65
    %p67 = scmp.ne.s32.totalorder %s59, %s61
    %p68 = scmp.eq.s32.totalorder %s16, 1
    %p69 = por %p67, %p68
    %p70 = scmp.ne.s32.totalorder %s61, %s62
    %p71 = scmp.eq.s32.totalorder %s16, 0
    %p72 = por %p70, %p71
    %p73 = scmp.ne.s32.totalorder %s61, %s62
    %p74 = scmp.eq.s32.totalorder %s17, 1
    %p75 = por %p73, %p74
    %p77 = scmp.ne.s32.totalorder %s62, %s76
    %p78 = scmp.eq.s32.totalorder %s17, 0
    %p79 = por %p77, %p78
    %s81 = sadd.s32 %s80, 1
    %p84 = scmp.eq.s32.totalorder %s11, 1
    %p85 = scmp.ne.s32.totalorder %s80, %s82
    %p86 = scmp.eq.s32.totalorder %s11, 0
    %p87 = por %p85, %p86
    %p88 = scmp.ne.s32.totalorder %s80, %s82
    %p89 = scmp.eq.s32.totalorder %s16, 1
    %p90 = por %p88, %p89
    %p91 = scmp.ne.s32.totalorder %s82, %s83
    %p92 = scmp.eq.s32.totalorder %s16, 0
    %p93 = por %p91, %p92
    %p94 = scmp.ne.s32.totalorder %s82, %s83
    %p95 = scmp.eq.s32.totalorder %s17, 1
    %p96 = por %p94, %p95
    %p98 = scmp.ne.s32.totalorder %s83, %s97
    %p99 = scmp.eq.s32.totalorder %s17, 0
    %p100 = por %p98, %p99
    %s101 = ssub.s32 %s18, %s30
    %p102 = scmp.eq.s32.totalorder %s101, 0
    %s104 = sadd.s32 %s103, 1
    %s105 = scalar_select %p102, %s103, %s104
    %p108 = pneg %p102
    %p109 = scmp.eq.s32.totalorder %s11, 1
    %p110 = por %p108, %p109
    %p111 = scmp.ne.s32.totalorder %s103, %s106
    %p112 = scmp.eq.s32.totalorder %s11, 0
    %p113 = por %p111, %p112
    %p114 = scmp.ne.s32.totalorder %s103, %s106
    %p115 = scmp.eq.s32.totalorder %s16, 1
    %p116 = por %p114, %p115
    %p117 = scmp.ne.s32.totalorder %s106, %s107
    %p118 = scmp.eq.s32.totalorder %s16, 0
    %p119 = por %p117, %p118
    %p120 = scmp.ne.s32.totalorder %s106, %s107
    %p121 = scmp.eq.s32.totalorder %s17, 1
    %p122 = por %p120, %p121
    %p124 = scmp.ne.s32.totalorder %s107, %s123
    %p125 = scmp.eq.s32.totalorder %s17, 0
    %p126 = por %p124, %p125
    %s127 = ssub.s32 %s18, %s30
    %p128 = scmp.eq.s32.totalorder %s127, 0
    %s130 = sadd.s32 %s129, 1
    %s131 = scalar_select %p128, %s129, %s130
    %p134 = pneg %p128
    %p135 = scmp.eq.s32.totalorder %s11, 1
    %p136 = por %p134, %p135
    %p137 = scmp.ne.s32.totalorder %s129, %s132
    %p138 = scmp.eq.s32.totalorder %s11, 0
    %p139 = por %p137, %p138
    %p140 = scmp.ne.s32.totalorder %s129, %s132
    %p141 = scmp.eq.s32.totalorder %s16, 1
    %p142 = por %p140, %p141
    %p143 = scmp.ne.s32.totalorder %s132, %s133
    %p144 = scmp.eq.s32.totalorder %s16, 0
    %p145 = por %p143, %p144
    %p146 = scmp.ne.s32.totalorder %s132, %s133
    %p147 = scmp.eq.s32.totalorder %s17, 1
    %p148 = por %p146, %p147
    %p150 = scmp.ne.s32.totalorder %s133, %s149
    %p151 = scmp.eq.s32.totalorder %s17, 0
    %p152 = por %p150, %p151
    %p153 = scmp.le.s32.totalorder 1, %s11
    %p154 = scmp.lt.s32.totalorder %s11, 3
    %p155 = pnand %p153, %p154
    %p156 = pneg %p155
    // Predicated region
    $region9: #{se_basic_block.3} parent=5 // pred_check
      _
    $region10: #{se_basic_block.3} parent=5 // pred_check_branch
      %158 = sbr.rel (%p155) target = $region12
    $region11: #{se_basic_block.3} parent=5 // pred_region
      %s159 = ssub.s32 %s11, 1
      // Predicated region
      $region13: #{se_basic_block.3} parent=11 // pred_check
        %p160 = pneg %p72
      $region14: #{se_basic_block.3} parent=11 // pred_check_branch
        %162 = sbr.rel (%p160) target = $region16
      $region15: #{se_basic_block.3} parent=11 // pred_region
        _
      $region16: #{se_basic_block.3} parent=11 // pred_fallthru
        _
      // Predicated region
      $region17: #{se_basic_block.3} parent=11 // pred_check
        %p163 = pneg %p93
      $region18: #{se_basic_block.3} parent=11 // pred_check_branch
        %165 = sbr.rel (%p163) target = $region20
      $region19: #{se_basic_block.3} parent=11 // pred_region
        _
      $region20: #{se_basic_block.3} parent=11 // pred_fallthru
        _
    $region12: #{se_basic_block.3} parent=5 // pred_fallthru
      _
    %p166 = scmp.lt.s32.totalorder %s11, 2
    // Predicated region
    $region21: #{se_basic_block.3} parent=5 // pred_check
      %p167 = pneg %p166
    $region22: #{se_basic_block.3} parent=5 // pred_check_branch
      %169 = sbr.rel (%p167) target = $region24
    $region23: #{se_basic_block.3} parent=5 // pred_region
      // Predicated region
      $region25: #{se_basic_block.3} parent=23 // pred_check
        %p170 = pneg %p45
      $region26: #{se_basic_block.3} parent=23 // pred_check_branch
        %172 = sbr.rel (%p170) target = $region28
      $region27: #{se_basic_block.3} parent=23 // pred_region
        %p173 = scmp.lt.s32.totalorder %s18, 1
        %s174 = scalar_select %p173, %s18, 1
        %p175 = scmp.lt.s32.totalorder %s19, 0
        %s176 = scalar_select %p175, %s19, 0
        %s177 = smul.addr %s174, 4
        %s178 = sadd.s32 %s176, %s177
        %s179 = smul.addr %s178, 8
        %s180 = scalar_lea.vmem %s0, %s179
      $region28: #{se_basic_block.3} parent=23 // pred_fallthru
        _
    $region24: #{se_basic_block.3} parent=5 // pred_fallthru
      _
    %p181 = scmp.le.s32.totalorder 1, %s11
    %p182 = scmp.lt.s32.totalorder %s11, 3
    %p183 = pnand %p181, %p182
    %p184 = pneg %p183
    // Predicated region
    $region29: #{se_basic_block.3} parent=5 // pred_check
      _
    $region30: #{se_basic_block.3} parent=5 // pred_check_branch
      %186 = sbr.rel (%p183) target = $region32
    $region31: #{se_basic_block.3} parent=5 // pred_region
      %s187 = ssub.s32 %s11, 1
      %p188 = scmp.lt.s32.totalorder %s20, 1
      %s189 = scalar_select %p188, %s20, 1
      %p190 = scmp.lt.s32.totalorder %s21, 0
      %s191 = scalar_select %p190, %s21, 0
      %s192 = smul.addr %s189, 4
      %s193 = sadd.s32 %s191, %s192
      %s194 = smul.addr %s193, 8
      %s195 = scalar_lea.vmem %s0, %s194
      %p196 = pneg %p51
      %p197 = pneg %p48
      %p198 = pneg %p72
      %p199 = pneg %p69
      %p200 = pneg %p93
      %p201 = pneg %p90
      %p202 = pneg %p119
      %p203 = pneg %p116
      %p204 = scmp.lt.s32.totalorder %s20, 1
      %s205 = scalar_select %p204, %s20, 1
      %s206 = smul.addr %s205, 4
      %s207 = smul.addr %s206, 8
      %s208 = scalar_lea.vmem %s3, %s207
      %p209 = pneg %p145
      %p210 = pneg %p142
      %p211 = scmp.lt.s32.totalorder %s20, 1
      %s212 = scalar_select %p211, %s20, 1
      %s213 = smul.addr %s212, 4
      %s214 = smul.addr %s213, 8
      %s215 = scalar_lea.vmem %s4, %s214
      %p216 = scmp.lt.s32.totalorder %s20, 1
      %s217 = scalar_select %p216, %s20, 1
      %p218 = scmp.lt.s32.totalorder %s21, 0
      %s219 = scalar_select %p218, %s21, 0
      %s220 = smul.addr %s217, 4
      %s221 = sadd.s32 %s219, %s220
      %s222 = smul.addr %s221, 8
      %s223 = scalar_lea.vmem %s0, %s222
      %p224 = scmp.lt.s32.totalorder %s20, 1
      %s225 = scalar_select %p224, %s20, 1
      %s226 = smul.addr %s225, 4
      %s227 = smul.addr %s226, 8
      %s228 = scalar_lea.vmem %s3, %s227
      %p229 = scmp.lt.s32.totalorder %s20, 1
      %s230 = scalar_select %p229, %s20, 1
      %s231 = smul.addr %s230, 4
      %s232 = smul.addr %s231, 8
      %s233 = scalar_lea.vmem %s4, %s232
      %p235 = scmp.eq.s32.totalorder %s21, 0
      // Predicated region
      $region33: #{se_basic_block.3} parent=31 // pred_check
        %p236 = pneg %p235
      $region34: #{se_basic_block.3} parent=31 // pred_check_branch
        %238 = sbr.rel (%p236) target = $region36
      $region35: #{se_basic_block.3} parent=31 // pred_region
        %vm239 = vcmask 7168
        %240 = vst.msk [vmem:[%s228] sm:$0xff] %vm239, 0.0
        %241 = vst.msk [vmem:[%s228 + $0x8] sm:$0xff] %vm239, 0.0
        %242 = vst.msk [vmem:[%s228 + $0x10] sm:$0xff] %vm239, 0.0
        %243 = vst.msk [vmem:[%s228 + $0x18] sm:$0xff] %vm239, 0.0
        %244 = vst.msk [vmem:[%s233] sm:$0xff] %vm239, 0.0
        %245 = vst.msk [vmem:[%s233 + $0x8] sm:$0xff] %vm239, 0.0
        %246 = vst.msk [vmem:[%s233 + $0x10] sm:$0xff] %vm239, 0.0
        %247 = vst.msk [vmem:[%s233 + $0x18] sm:$0xff] %vm239, 0.0
      $region36: #{se_basic_block.3} parent=31 // pred_fallthru
        _
      %v248 = vld [vmem:[%s223] sm:$0xff]
      %v249 = vld [vmem:[%s223 + $0x8] sm:$0xff]
      %v250 = vld [vmem:[%s223 + $0x10] sm:$0xff]
      %v251 = vld [vmem:[%s223 + $0x18] sm:$0xff]
      %v252 = vpack.c.bf16 %v249, %v248
      %v253 = vpack.c.bf16 %v251, %v250
      %v254 = vld [vmem:[%s1] sm:$0xf]
      %v255 = vld [vmem:[%s1 + $0x4] sm:$0xf]
      %v256 = vld [vmem:[%s1 + $0x8] sm:$0xf]
      %v257 = vld [vmem:[%s1 + $0xc] sm:$0xf]
      %v258 = vld [vmem:[%s2] sm:$0xff]
      %v259 = vld [vmem:[%s2 + $0x8] sm:$0xff]
      %v260 = vld [vmem:[%s2 + $0x10] sm:$0xff]
      %v261 = vld [vmem:[%s2 + $0x18] sm:$0xff]
      %263 = vset.pattern.permute.xlu0 0
      %264 = vperm.xlu0 %263, %v258
      %v265 = vpop.permute.xlu0 %264
      %268 = vset.pattern.permute.xlu0 0
      %269 = vperm.xlu0 %268, %v259
      %v270 = vpop.permute.xlu0 %269
      %273 = vset.pattern.permute.xlu0 0
      %274 = vperm.xlu0 %273, %v260
      %v275 = vpop.permute.xlu0 %274
      %278 = vset.pattern.permute.xlu0 0
      %279 = vperm.xlu0 %278, %v261
      %v280 = vpop.permute.xlu0 %279
      %v286 = vunpack.c.l.b16 %v254
      %v287 = vunpack.c.l.b16 %v255
      %v288 = vunpack.c.l.b16 %v256
      %v289 = vunpack.c.l.b16 %v257
      %v290 = vpack.c.b16 %v287, %v286
      %v291 = vpack.c.b16 %v289, %v288
      %vm292 = vcmask 261120
      %v294 = vsel %vm292, %v290, 0
      %v297 = vsel %vm292, %v291, 0
      %299 = vmatprep.subr.bf16.mxu0 0
      %300 = vmatpush1.bf16.msra.mxu0 %v252
      %301 = vmatprep.subr.bf16.mxu0 0
      %302 = vmatpush1.bf16.msra.mxu0 %v253
      %303 = vmatprep.subr.bf16.mxu0 0
      %304 = vmatpush1.bf16.msra.mxu0 0
      %305 = vmatprep.subr.bf16.mxu0 0
      %306 = vmatpush1.bf16.msra.mxu0 0
      %307 = vmatprep.subr.bf16.mxu0 0
      %308 = vmatpush1.bf16.msra.mxu0 0
      %309 = vmatprep.subr.bf16.mxu0 0
      %310 = vmatpush1.bf16.msra.mxu0 0
      %311 = vmatprep.subr.bf16.mxu0 0
      %312 = vmatpush1.bf16.msra.mxu0 0
      %313 = vmatprep.subr.bf16.mxu0 0
      %314 = vmatpush1.bf16.msra.mxu0 0
      %315 = vmatprep.subr.bf16.mxu0 0
      %316 = vmatpush1.bf16.msra.mxu0 0
      %317 = vmatprep.subr.bf16.mxu0 0
      %318 = vmatpush1.bf16.msra.mxu0 0
      %319 = vmatprep.subr.bf16.mxu0 0
      %320 = vmatpush1.bf16.msra.mxu0 0
      %321 = vmatprep.subr.bf16.mxu0 0
      %322 = vmatpush1.bf16.msra.mxu0 0
      %323 = vmatprep.subr.bf16.mxu0 0
      %324 = vmatpush1.bf16.msra.mxu0 0
      %325 = vmatprep.subr.bf16.mxu0 0
      %326 = vmatpush1.bf16.msra.mxu0 0
      %327 = vmatprep.subr.bf16.mxu0 0
      %328 = vmatpush1.bf16.msra.mxu0 0
      %329 = vmatprep.subr.bf16.mxu0 0
      %330 = vmatpush1.bf16.msra.mxu0 0
      %331 = vmatprep.mubr.bf16.mxu0 0
      %332 = vmatmul.mubr.bf16.gmra.mrb[0].mxu0 %v294
      %v333 = vpop.f32.mrb[0].mxu0
      %v334 = vadd.f32 %v265, %v333
      %v335 = vpop.f32.mrb[0].mxu0
      %v336 = vpop.f32.mrb[0].mxu0
      %v337 = vadd.f32 %v270, %v336
      %v338 = vpop.f32.mrb[0].mxu0
      %339 = vmatprep.mubr.bf16.mxu0 0
      %340 = vmatmul.mubr.bf16.gmra.mrb[0].mxu0 %v297
      %v341 = vpop.f32.mrb[0].mxu0
      %v342 = vadd.f32 %v275, %v341
      %v343 = vpop.f32.mrb[0].mxu0
      %v344 = vpop.f32.mrb[0].mxu0
      %v345 = vadd.f32 %v280, %v344
      %v346 = vpop.f32.mrb[0].mxu0
      %347 = vdwg.mxu0
      %s348 = smul.u32 %s21, 128
      %v349 = vlaneseq
      %v350 = vand.u32 %v349, 127
      %v351 = vstv %s348
      %v352 = vadd.s32 %v351, %v350
      %vm353 = vcmp.lt.s32.totalorder %v352, 16
      %v354 = vsel %vm353, 1, 0
      %v355 = vcvt.s32.f32 %v354
      %v356 = vmul.f32 %v334, %v355
      %v357 = vmul.f32 %v337, %v355
      %v358 = vmul.f32 %v342, %v355
      %v359 = vmul.f32 %v345, %v355
      %v360 = vld [vmem:[%s228] sm:$0xff]
      %v361 = vld [vmem:[%s228 + $0x8] sm:$0xff]
      %v362 = vld [vmem:[%s228 + $0x10] sm:$0xff]
      %v363 = vld [vmem:[%s228 + $0x18] sm:$0xff]
      %364 = vadd.xlane.f32.xlu0 %v356
      %v365 = vpop.xlane.xlu0 %364
      %366 = vadd.xlane.f32.xlu0 %v357
      %v367 = vpop.xlane.xlu0 %366
      %368 = vadd.xlane.f32.xlu0 %v358
      %v369 = vpop.xlane.xlu0 %368
      %370 = vadd.xlane.f32.xlu0 %v359
      %v371 = vpop.xlane.xlu0 %370
      %v372 = vadd.f32 %v360, %v365
      %v373 = vadd.f32 %v361, %v367
      %v374 = vadd.f32 %v362, %v369
      %v375 = vadd.f32 %v363, %v371
      %vm376 = vcmask 7168
      %377 = vst.msk [vmem:[%s228] sm:$0xff] %vm376, %v372
      %378 = vst.msk [vmem:[%s228 + $0x8] sm:$0xff] %vm376, %v373
      %379 = vst.msk [vmem:[%s228 + $0x10] sm:$0xff] %vm376, %v374
      %380 = vst.msk [vmem:[%s228 + $0x18] sm:$0xff] %vm376, %v375
      %v381 = vld [vmem:[%s233] sm:$0xff]
      %v382 = vld [vmem:[%s233 + $0x8] sm:$0xff]
      %v383 = vld [vmem:[%s233 + $0x10] sm:$0xff]
      %v384 = vld [vmem:[%s233 + $0x18] sm:$0xff]
      %v385 = vmul.f32 %v356, %v356
      %v386 = vmul.f32 %v357, %v357
      %v387 = vmul.f32 %v358, %v358
      %v388 = vmul.f32 %v359, %v359
      %389 = vadd.xlane.f32.xlu0 %v385
      %v390 = vpop.xlane.xlu0 %389
      %391 = vadd.xlane.f32.xlu0 %v386
      %v392 = vpop.xlane.xlu0 %391
      %393 = vadd.xlane.f32.xlu0 %v387
      %v394 = vpop.xlane.xlu0 %393
      %395 = vadd.xlane.f32.xlu0 %v388
      %v396 = vpop.xlane.xlu0 %395
      %v397 = vadd.f32 %v381, %v390
      %v398 = vadd.f32 %v382, %v392
      %v399 = vadd.f32 %v383, %v394
      %v400 = vadd.f32 %v384, %v396
      %401 = vst.msk [vmem:[%s233] sm:$0xff] %vm376, %v397
      %402 = vst.msk [vmem:[%s233 + $0x8] sm:$0xff] %vm376, %v398
      %403 = vst.msk [vmem:[%s233 + $0x10] sm:$0xff] %vm376, %v399
      %404 = vst.msk [vmem:[%s233 + $0x18] sm:$0xff] %vm376, %v400
      %p405 = scmp.lt.s32.totalorder %s20, 1
      %s406 = scalar_select %p405, %s20, 1
      %s407 = smul.addr %s406, 4
      %s408 = smul.addr %s407, 8
      %s409 = scalar_lea.vmem %s3, %s408
      %p410 = scmp.lt.s32.totalorder %s20, 1
      %s411 = scalar_select %p410, %s20, 1
      %s412 = smul.addr %s411, 4
      %s413 = smul.addr %s412, 8
      %s414 = scalar_lea.vmem %s4, %s413
      // Predicated region
      $region37: #{se_basic_block.3} parent=31 // pred_check
        %p415 = pneg %p116
      $region38: #{se_basic_block.3} parent=31 // pred_check_branch
        %417 = sbr.rel (%p415) target = $region40
      $region39: #{se_basic_block.3} parent=31 // pred_region
        _
      $region40: #{se_basic_block.3} parent=31 // pred_fallthru
        _
      // Predicated region
      $region41: #{se_basic_block.3} parent=31 // pred_check
        %p418 = pneg %p142
      $region42: #{se_basic_block.3} parent=31 // pred_check_branch
        %420 = sbr.rel (%p418) target = $region44
      $region43: #{se_basic_block.3} parent=31 // pred_region
        _
      $region44: #{se_basic_block.3} parent=31 // pred_fallthru
        _
    $region32: #{se_basic_block.3} parent=5 // pred_fallthru
      _
    %p421 = scmp.le.s32.totalorder 2, %s11
    // Predicated region
    $region45: #{se_basic_block.3} parent=5 // pred_check
      %p422 = pneg %p421
    $region46: #{se_basic_block.3} parent=5 // pred_check_branch
      %424 = sbr.rel (%p422) target = $region48
    $region47: #{se_basic_block.3} parent=5 // pred_region
      %s425 = ssub.s32 %s11, 2
      // Predicated region
      $region49: #{se_basic_block.3} parent=47 // pred_check
        %p426 = pneg %p122
      $region50: #{se_basic_block.3} parent=47 // pred_check_branch
        %428 = sbr.rel (%p426) target = $region52
      $region51: #{se_basic_block.3} parent=47 // pred_region
        %p429 = scmp.lt.s32.totalorder %s22, 1
        %s430 = scalar_select %p429, %s22, 1
        %s431 = smul.addr %s430, 4
        %s432 = smul.addr %s431, 8
        %s433 = scalar_lea.vmem %s3, %s432
      $region52: #{se_basic_block.3} parent=47 // pred_fallthru
        _
      // Predicated region
      $region53: #{se_basic_block.3} parent=47 // pred_check
        %p434 = pneg %p148
      $region54: #{se_basic_block.3} parent=47 // pred_check_branch
        %436 = sbr.rel (%p434) target = $region56
      $region55: #{se_basic_block.3} parent=47 // pred_region
        %p437 = scmp.lt.s32.totalorder %s22, 1
        %s438 = scalar_select %p437, %s22, 1
        %s439 = smul.addr %s438, 4
        %s440 = smul.addr %s439, 8
        %s441 = scalar_lea.vmem %s4, %s440
      $region56: #{se_basic_block.3} parent=47 // pred_fallthru
        _
    $region48: #{se_basic_block.3} parent=5 // pred_fallthru
      _
  $region6: #{se_basic_block.3} parent=0 // loop_footer
    %s15 = sadd.s32 1, %s11
  $region7: #{se_basic_block.3} parent=0 // loop_footer_branch
    %10 = sbr.rel target = $region3
  $region8: #{se_basic_block.3} parent=0 // loop_exit
    _

// kernel: se_basic_block.4
$region0: #{se_basic_block.4}
  #allocation0 [shape = 'u32[]', space=smem, size = 0x4, offset = 0x4, fixed_abs, tag = 'smem constant byte address 0x4 - core index']
  #allocation1 [shape = 'u32[144,128]{1,0:T(1,128)}', space=vmem, size = 0x12000, scoped, tag = 'internal scratch']
  %s0 = inlined_call_operand.vmem [shape: f32[2,32,128], index: 0, kind: input, shape index: {}]
  %s1 = inlined_call_operand.vmem [shape: bf16[32,32], index: 1, kind: input, shape index: {}]
  %s2 = inlined_call_operand.vmem [shape: f32[32,1], index: 2, kind: input, shape index: {}]
  %s3 = inlined_call_operand.vmem [shape: f32[32,1], index: 3, kind: input, shape index: {}]
  %s4 = inlined_call_operand.vmem [shape: f32[32,1], index: 4, kind: input, shape index: {}]
  %s5 = inlined_call_operand.vmem [shape: bf16[32,32], index: 5, kind: input, shape index: {}]
  %s6 = inlined_call_operand.vmem [shape: f32[32,1], index: 6, kind: input, shape index: {}]
  %s7 = inlined_call_operand.vmem [shape: f32[2,32,128], index: 7, kind: output, shape index: {0}]
  %s8 = inlined_call_operand.vmem [shape: f32[2,32,1], index: 8, kind: output, shape index: {1}]
  %s9 = inlined_call_operand.vmem [shape: f32[2,32,1], index: 9, kind: output, shape index: {2}]
  %10 = xla_tuple %s7, %s8, %s9
  %s11 = sld [smem:[#allocation0]]
  $region81: #{se_basic_block.4} parent=0
    _
  %s13 = ssub.s32 1, %s11
  %s14 = scalar_select 0, %s13, %s11
  loop: start=0, step=1, limit=4
  $region2: #{se_basic_block.4} parent=0 // loop_pre_header
    _
  $region3: #{se_basic_block.4} parent=0 // loop_header
    %s16 = sphi 0, %s20
    %p17 = scmp.ge.s32.totalorder %s16, 4
    %s23 = sphi 0, %s35
    %s24 = sphi 0, %s31
    %s25 = sphi 0, %s23
    %s26 = sphi 0, %s24
    %s27 = sphi 0, %s25
    %s28 = sphi 0, %s26
    %s40 = sphi 0, %s42
    %s43 = sphi 0, %s40
    %s44 = sphi 0, %s43
    %s60 = sphi 0, %s44
    %s64 = sphi 0, %s64
    %s66 = sphi 0, %s64
    %s67 = sphi 0, %s66
    %s81 = sphi 0, %s67
    %s85 = sphi 0, %s85
    %s87 = sphi 0, %s85
    %s88 = sphi 0, %s87
    %s102 = sphi 0, %s88
    %s106 = sphi 0, %s106
    %s108 = sphi 0, %s106
    %s109 = sphi 0, %s108
    %s123 = sphi 0, %s109
    %s127 = sphi 0, %s127
    %s129 = sphi 0, %s127
    %s130 = sphi 0, %s129
    %s144 = sphi 0, %s130
    %s148 = sphi 0, %s148
    %s150 = sphi 0, %s148
    %s151 = sphi 0, %s150
    %s165 = sphi 0, %s151
    %s169 = sphi 0, %s169
    %s171 = sphi 0, %s169
    %s172 = sphi 0, %s171
    %s186 = sphi 0, %s172
    %s194 = sphi 0, %s196
    %s197 = sphi 0, %s194
    %s198 = sphi 0, %s197
    %s214 = sphi 0, %s198
    %s220 = sphi 0, %s222
    %s223 = sphi 0, %s220
    %s224 = sphi 0, %s223
    %s240 = sphi 0, %s224
    %s246 = sphi 0, %s248
    %s249 = sphi 0, %s246
    %s250 = sphi 0, %s249
    %s266 = sphi 0, %s250
  $region4: #{se_basic_block.4} parent=0 // loop_header_branch
    %19 = sbr.rel (%p17) target = $region8
  $region5: #{se_basic_block.4} parent=0 // loop_body
    %s21 = ssub.s32 %s16, 1
    %s22 = ssub.s32 %s16, 2
    %s29 = sadd.s32 1, %s24
    %p30 = scmp.ge.s32.totalorder %s29, 1
    %s31 = scalar_select %p30, 0, %s29
    %s32 = sadd.s32 1, %s23
    %s33 = scalar_select %p30, %s32, %s23
    %p34 = scmp.ge.s32.totalorder %s33, 2
    %s35 = scalar_select %p34, 0, %s33
    %s36 = ssub.s32 %s23, %s35
    %s37 = ssub.s32 %s24, %s31
    %s38 = sor.u32 %s36, %s37
    %p39 = scmp.eq.s32.totalorder %s38, 0
    %s41 = sadd.s32 %s40, 1
    %s42 = scalar_select %p39, %s40, %s41
    %p45 = pneg %p39
    %p46 = scmp.eq.s32.totalorder %s16, 1
    %p47 = por %p45, %p46
    %p48 = scmp.ne.s32.totalorder %s40, %s43
    %p49 = scmp.eq.s32.totalorder %s16, 0
    %p50 = por %p48, %p49
    %p51 = scmp.ne.s32.totalorder %s40, %s43
    %p52 = scmp.eq.s32.totalorder %s21, 1
    %p53 = por %p51, %p52
    %p54 = scmp.ne.s32.totalorder %s43, %s44
    %p55 = scmp.eq.s32.totalorder %s21, 0
    %p56 = por %p54, %p55
    %p57 = scmp.ne.s32.totalorder %s43, %s44
    %p58 = scmp.eq.s32.totalorder %s22, 1
    %p59 = por %p57, %p58
    %p61 = scmp.ne.s32.totalorder %s44, %s60
    %p62 = scmp.eq.s32.totalorder %s22, 0
    %p63 = por %p61, %p62
    %s65 = sadd.s32 %s64, 1
    %p68 = scmp.eq.s32.totalorder %s16, 1
    %p69 = scmp.ne.s32.totalorder %s64, %s66
    %p70 = scmp.eq.s32.totalorder %s16, 0
    %p71 = por %p69, %p70
    %p72 = scmp.ne.s32.totalorder %s64, %s66
    %p73 = scmp.eq.s32.totalorder %s21, 1
    %p74 = por %p72, %p73
    %p75 = scmp.ne.s32.totalorder %s66, %s67
    %p76 = scmp.eq.s32.totalorder %s21, 0
    %p77 = por %p75, %p76
    %p78 = scmp.ne.s32.totalorder %s66, %s67
    %p79 = scmp.eq.s32.totalorder %s22, 1
    %p80 = por %p78, %p79
    %p82 = scmp.ne.s32.totalorder %s67, %s81
    %p83 = scmp.eq.s32.totalorder %s22, 0
    %p84 = por %p82, %p83
    %s86 = sadd.s32 %s85, 1
    %p89 = scmp.eq.s32.totalorder %s16, 1
    %p90 = scmp.ne.s32.totalorder %s85, %s87
    %p91 = scmp.eq.s32.totalorder %s16, 0
    %p92 = por %p90, %p91
    %p93 = scmp.ne.s32.totalorder %s85, %s87
    %p94 = scmp.eq.s32.totalorder %s21, 1
    %p95 = por %p93, %p94
    %p96 = scmp.ne.s32.totalorder %s87, %s88
    %p97 = scmp.eq.s32.totalorder %s21, 0
    %p98 = por %p96, %p97
    %p99 = scmp.ne.s32.totalorder %s87, %s88
    %p100 = scmp.eq.s32.totalorder %s22, 1
    %p101 = por %p99, %p100
    %p103 = scmp.ne.s32.totalorder %s88, %s102
    %p104 = scmp.eq.s32.totalorder %s22, 0
    %p105 = por %p103, %p104
    %s107 = sadd.s32 %s106, 1
    %p110 = scmp.eq.s32.totalorder %s16, 1
    %p111 = scmp.ne.s32.totalorder %s106, %s108
    %p112 = scmp.eq.s32.totalorder %s16, 0
    %p113 = por %p111, %p112
    %p114 = scmp.ne.s32.totalorder %s106, %s108
    %p115 = scmp.eq.s32.totalorder %s21, 1
    %p116 = por %p114, %p115
    %p117 = scmp.ne.s32.totalorder %s108, %s109
    %p118 = scmp.eq.s32.totalorder %s21, 0
    %p119 = por %p117, %p118
    %p120 = scmp.ne.s32.totalorder %s108, %s109
    %p121 = scmp.eq.s32.totalorder %s22, 1
    %p122 = por %p120, %p121
    %p124 = scmp.ne.s32.totalorder %s109, %s123
    %p125 = scmp.eq.s32.totalorder %s22, 0
    %p126 = por %p124, %p125
    %s128 = sadd.s32 %s127, 1
    %p131 = scmp.eq.s32.totalorder %s16, 1
    %p132 = scmp.ne.s32.totalorder %s127, %s129
    %p133 = scmp.eq.s32.totalorder %s16, 0
    %p134 = por %p132, %p133
    %p135 = scmp.ne.s32.totalorder %s127, %s129
    %p136 = scmp.eq.s32.totalorder %s21, 1
    %p137 = por %p135, %p136
    %p138 = scmp.ne.s32.totalorder %s129, %s130
    %p139 = scmp.eq.s32.totalorder %s21, 0
    %p140 = por %p138, %p139
    %p141 = scmp.ne.s32.totalorder %s129, %s130
    %p142 = scmp.eq.s32.totalorder %s22, 1
    %p143 = por %p141, %p142
    %p145 = scmp.ne.s32.totalorder %s130, %s144
    %p146 = scmp.eq.s32.totalorder %s22, 0
    %p147 = por %p145, %p146
    %s149 = sadd.s32 %s148, 1
    %p152 = scmp.eq.s32.totalorder %s16, 1
    %p153 = scmp.ne.s32.totalorder %s148, %s150
    %p154 = scmp.eq.s32.totalorder %s16, 0
    %p155 = por %p153, %p154
    %p156 = scmp.ne.s32.totalorder %s148, %s150
    %p157 = scmp.eq.s32.totalorder %s21, 1
    %p158 = por %p156, %p157
    %p159 = scmp.ne.s32.totalorder %s150, %s151
    %p160 = scmp.eq.s32.totalorder %s21, 0
    %p161 = por %p159, %p160
    %p162 = scmp.ne.s32.totalorder %s150, %s151
    %p163 = scmp.eq.s32.totalorder %s22, 1
    %p164 = por %p162, %p163
    %p166 = scmp.ne.s32.totalorder %s151, %s165
    %p167 = scmp.eq.s32.totalorder %s22, 0
    %p168 = por %p166, %p167
    %s170 = sadd.s32 %s169, 1
    %p173 = scmp.eq.s32.totalorder %s16, 1
    %p174 = scmp.ne.s32.totalorder %s169, %s171
    %p175 = scmp.eq.s32.totalorder %s16, 0
    %p176 = por %p174, %p175
    %p177 = scmp.ne.s32.totalorder %s169, %s171
    %p178 = scmp.eq.s32.totalorder %s21, 1
    %p179 = por %p177, %p178
    %p180 = scmp.ne.s32.totalorder %s171, %s172
    %p181 = scmp.eq.s32.totalorder %s21, 0
    %p182 = por %p180, %p181
    %p183 = scmp.ne.s32.totalorder %s171, %s172
    %p184 = scmp.eq.s32.totalorder %s22, 1
    %p185 = por %p183, %p184
    %p187 = scmp.ne.s32.totalorder %s172, %s186
    %p188 = scmp.eq.s32.totalorder %s22, 0
    %p189 = por %p187, %p188
    %s190 = ssub.s32 %s23, %s35
    %s191 = ssub.s32 %s24, %s31
    %s192 = sor.u32 %s190, %s191
    %p193 = scmp.eq.s32.totalorder %s192, 0
    %s195 = sadd.s32 %s194, 1
    %s196 = scalar_select %p193, %s194, %s195
    %p199 = pneg %p193
    %p200 = scmp.eq.s32.totalorder %s16, 1
    %p201 = por %p199, %p200
    %p202 = scmp.ne.s32.totalorder %s194, %s197
    %p203 = scmp.eq.s32.totalorder %s16, 0
    %p204 = por %p202, %p203
    %p205 = scmp.ne.s32.totalorder %s194, %s197
    %p206 = scmp.eq.s32.totalorder %s21, 1
    %p207 = por %p205, %p206
    %p208 = scmp.ne.s32.totalorder %s197, %s198
    %p209 = scmp.eq.s32.totalorder %s21, 0
    %p210 = por %p208, %p209
    %p211 = scmp.ne.s32.totalorder %s197, %s198
    %p212 = scmp.eq.s32.totalorder %s22, 1
    %p213 = por %p211, %p212
    %p215 = scmp.ne.s32.totalorder %s198, %s214
    %p216 = scmp.eq.s32.totalorder %s22, 0
    %p217 = por %p215, %p216
    %s218 = ssub.s32 %s23, %s35
    %p219 = scmp.eq.s32.totalorder %s218, 0
    %s221 = sadd.s32 %s220, 1
    %s222 = scalar_select %p219, %s220, %s221
    %p225 = pneg %p219
    %p226 = scmp.eq.s32.totalorder %s16, 1
    %p227 = por %p225, %p226
    %p228 = scmp.ne.s32.totalorder %s220, %s223
    %p229 = scmp.eq.s32.totalorder %s16, 0
    %p230 = por %p228, %p229
    %p231 = scmp.ne.s32.totalorder %s220, %s223
    %p232 = scmp.eq.s32.totalorder %s21, 1
    %p233 = por %p231, %p232
    %p234 = scmp.ne.s32.totalorder %s223, %s224
    %p235 = scmp.eq.s32.totalorder %s21, 0
    %p236 = por %p234, %p235
    %p237 = scmp.ne.s32.totalorder %s223, %s224
    %p238 = scmp.eq.s32.totalorder %s22, 1
    %p239 = por %p237, %p238
    %p241 = scmp.ne.s32.totalorder %s224, %s240
    %p242 = scmp.eq.s32.totalorder %s22, 0
    %p243 = por %p241, %p242
    %s244 = ssub.s32 %s23, %s35
    %p245 = scmp.eq.s32.totalorder %s244, 0
    %s247 = sadd.s32 %s246, 1
    %s248 = scalar_select %p245, %s246, %s247
    %p251 = pneg %p245
    %p252 = scmp.eq.s32.totalorder %s16, 1
    %p253 = por %p251, %p252
    %p254 = scmp.ne.s32.totalorder %s246, %s249
    %p255 = scmp.eq.s32.totalorder %s16, 0
    %p256 = por %p254, %p255
    %p257 = scmp.ne.s32.totalorder %s246, %s249
    %p258 = scmp.eq.s32.totalorder %s21, 1
    %p259 = por %p257, %p258
    %p260 = scmp.ne.s32.totalorder %s249, %s250
    %p261 = scmp.eq.s32.totalorder %s21, 0
    %p262 = por %p260, %p261
    %p263 = scmp.ne.s32.totalorder %s249, %s250
    %p264 = scmp.eq.s32.totalorder %s22, 1
    %p265 = por %p263, %p264
    %p267 = scmp.ne.s32.totalorder %s250, %s266
    %p268 = scmp.eq.s32.totalorder %s22, 0
    %p269 = por %p267, %p268
    %p270 = scmp.le.s32.totalorder 1, %s16
    %p271 = scmp.lt.s32.totalorder %s16, 3
    %p272 = pnand %p270, %p271
    %p273 = pneg %p272
    // Predicated region
    $region9: #{se_basic_block.4} parent=5 // pred_check
      _
    $region10: #{se_basic_block.4} parent=5 // pred_check_branch
      %275 = sbr.rel (%p272) target = $region12
    $region11: #{se_basic_block.4} parent=5 // pred_region
      %s276 = ssub.s32 %s16, 1
      // Predicated region
      $region13: #{se_basic_block.4} parent=11 // pred_check
        %p277 = pneg %p77
      $region14: #{se_basic_block.4} parent=11 // pred_check_branch
        %279 = sbr.rel (%p277) target = $region16
      $region15: #{se_basic_block.4} parent=11 // pred_region
        _
      $region16: #{se_basic_block.4} parent=11 // pred_fallthru
        _
      // Predicated region
      $region17: #{se_basic_block.4} parent=11 // pred_check
        %p280 = pneg %p98
      $region18: #{se_basic_block.4} parent=11 // pred_check_branch
        %282 = sbr.rel (%p280) target = $region20
      $region19: #{se_basic_block.4} parent=11 // pred_region
        _
      $region20: #{se_basic_block.4} parent=11 // pred_fallthru
        _
      // Predicated region
      $region21: #{se_basic_block.4} parent=11 // pred_check
        %p283 = pneg %p119
      $region22: #{se_basic_block.4} parent=11 // pred_check_branch
        %285 = sbr.rel (%p283) target = $region24
      $region23: #{se_basic_block.4} parent=11 // pred_region
        _
      $region24: #{se_basic_block.4} parent=11 // pred_fallthru
        _
      // Predicated region
      $region25: #{se_basic_block.4} parent=11 // pred_check
        %p286 = pneg %p140
      $region26: #{se_basic_block.4} parent=11 // pred_check_branch
        %288 = sbr.rel (%p286) target = $region28
      $region27: #{se_basic_block.4} parent=11 // pred_region
        _
      $region28: #{se_basic_block.4} parent=11 // pred_fallthru
        _
      // Predicated region
      $region29: #{se_basic_block.4} parent=11 // pred_check
        %p289 = pneg %p161
      $region30: #{se_basic_block.4} parent=11 // pred_check_branch
        %291 = sbr.rel (%p289) target = $region32
      $region31: #{se_basic_block.4} parent=11 // pred_region
        _
      $region32: #{se_basic_block.4} parent=11 // pred_fallthru
        _
      // Predicated region
      $region33: #{se_basic_block.4} parent=11 // pred_check
        %p292 = pneg %p182
      $region34: #{se_basic_block.4} parent=11 // pred_check_branch
        %294 = sbr.rel (%p292) target = $region36
      $region35: #{se_basic_block.4} parent=11 // pred_region
        _
      $region36: #{se_basic_block.4} parent=11 // pred_fallthru
        _
    $region12: #{se_basic_block.4} parent=5 // pred_fallthru
      _
    %p295 = scmp.lt.s32.totalorder %s16, 2
    // Predicated region
    $region37: #{se_basic_block.4} parent=5 // pred_check
      %p296 = pneg %p295
    $region38: #{se_basic_block.4} parent=5 // pred_check_branch
      %298 = sbr.rel (%p296) target = $region40
    $region39: #{se_basic_block.4} parent=5 // pred_region
      // Predicated region
      $region41: #{se_basic_block.4} parent=39 // pred_check
        %p299 = pneg %p50
      $region42: #{se_basic_block.4} parent=39 // pred_check_branch
        %301 = sbr.rel (%p299) target = $region44
      $region43: #{se_basic_block.4} parent=39 // pred_region
        %p302 = scmp.lt.s32.totalorder %s23, 1
        %s303 = scalar_select %p302, %s23, 1
        %p304 = scmp.lt.s32.totalorder %s24, 0
        %s305 = scalar_select %p304, %s24, 0
        %s306 = smul.addr %s303, 4
        %s307 = sadd.s32 %s305, %s306
        %s308 = smul.addr %s307, 8
        %s309 = scalar_lea.vmem %s0, %s308
      $region44: #{se_basic_block.4} parent=39 // pred_fallthru
        _
    $region40: #{se_basic_block.4} parent=5 // pred_fallthru
      _
    %p310 = scmp.le.s32.totalorder 1, %s16
    %p311 = scmp.lt.s32.totalorder %s16, 3
    %p312 = pnand %p310, %p311
    %p313 = pneg %p312
    // Predicated region
    $region45: #{se_basic_block.4} parent=5 // pred_check
      _
    $region46: #{se_basic_block.4} parent=5 // pred_check_branch
      %315 = sbr.rel (%p312) target = $region48
    $region47: #{se_basic_block.4} parent=5 // pred_region
      %s316 = ssub.s32 %s16, 1
      %p317 = scmp.lt.s32.totalorder %s25, 1
      %s318 = scalar_select %p317, %s25, 1
      %p319 = scmp.lt.s32.totalorder %s26, 0
      %s320 = scalar_select %p319, %s26, 0
      %s321 = smul.addr %s318, 4
      %s322 = sadd.s32 %s320, %s321
      %s323 = smul.addr %s322, 8
      %s324 = scalar_lea.vmem %s0, %s323
      %p325 = pneg %p56
      %p326 = pneg %p53
      %p327 = pneg %p77
      %p328 = pneg %p74
      %p329 = pneg %p98
      %p330 = pneg %p95
      %p331 = pneg %p119
      %p332 = pneg %p116
      %p333 = pneg %p140
      %p334 = pneg %p137
      %p335 = pneg %p161
      %p336 = pneg %p158
      %p337 = pneg %p182
      %p338 = pneg %p179
      %p339 = pneg %p210
      %p340 = pneg %p207
      %p341 = scmp.lt.s32.totalorder %s25, 1
      %s342 = scalar_select %p341, %s25, 1
      %p343 = scmp.lt.s32.totalorder %s26, 0
      %s344 = scalar_select %p343, %s26, 0
      %s345 = smul.addr %s342, 4
      %s346 = sadd.s32 %s344, %s345
      %s347 = smul.addr %s346, 8
      %s348 = scalar_lea.vmem %s7, %s347
      %p349 = pneg %p236
      %p350 = pneg %p233
      %p351 = scmp.lt.s32.totalorder %s25, 1
      %s352 = scalar_select %p351, %s25, 1
      %s353 = smul.addr %s352, 4
      %s354 = smul.addr %s353, 8
      %s355 = scalar_lea.vmem %s8, %s354
      %p356 = pneg %p262
      %p357 = pneg %p259
      %p358 = scmp.lt.s32.totalorder %s25, 1
      %s359 = scalar_select %p358, %s25, 1
      %s360 = smul.addr %s359, 4
      %s361 = smul.addr %s360, 8
      %s362 = scalar_lea.vmem %s9, %s361
      %p363 = scmp.lt.s32.totalorder %s25, 1
      %s364 = scalar_select %p363, %s25, 1
      %p365 = scmp.lt.s32.totalorder %s26, 0
      %s366 = scalar_select %p365, %s26, 0
      %s367 = smul.addr %s364, 4
      %s368 = sadd.s32 %s366, %s367
      %s369 = smul.addr %s368, 8
      %s370 = scalar_lea.vmem %s0, %s369
      %p371 = scmp.lt.s32.totalorder %s25, 1
      %s372 = scalar_select %p371, %s25, 1
      %p373 = scmp.lt.s32.totalorder %s26, 0
      %s374 = scalar_select %p373, %s26, 0
      %s375 = smul.addr %s372, 4
      %s376 = sadd.s32 %s374, %s375
      %s377 = smul.addr %s376, 8
      %s378 = scalar_lea.vmem %s7, %s377
      %p379 = scmp.lt.s32.totalorder %s25, 1
      %s380 = scalar_select %p379, %s25, 1
      %s381 = smul.addr %s380, 4
      %s382 = smul.addr %s381, 8
      %s383 = scalar_lea.vmem %s8, %s382
      %p384 = scmp.lt.s32.totalorder %s25, 1
      %s385 = scalar_select %p384, %s25, 1
      %s386 = smul.addr %s385, 4
      %s387 = smul.addr %s386, 8
      %s388 = scalar_lea.vmem %s9, %s387
      %p390 = scmp.eq.s32.totalorder %s26, 0
      // Predicated region
      $region49: #{se_basic_block.4} parent=47 // pred_check
        %p391 = pneg %p390
      $region50: #{se_basic_block.4} parent=47 // pred_check_branch
        %393 = sbr.rel (%p391) target = $region52
      $region51: #{se_basic_block.4} parent=47 // pred_region
        %vm394 = vcmask 7168
        %395 = vst.msk [vmem:[%s383] sm:$0xff] %vm394, 0.0
        %396 = vst.msk [vmem:[%s383 + $0x8] sm:$0xff] %vm394, 0.0
        %397 = vst.msk [vmem:[%s383 + $0x10] sm:$0xff] %vm394, 0.0
        %398 = vst.msk [vmem:[%s383 + $0x18] sm:$0xff] %vm394, 0.0
        %399 = vst.msk [vmem:[%s388] sm:$0xff] %vm394, 0.0
        %400 = vst.msk [vmem:[%s388 + $0x8] sm:$0xff] %vm394, 0.0
        %401 = vst.msk [vmem:[%s388 + $0x10] sm:$0xff] %vm394, 0.0
        %402 = vst.msk [vmem:[%s388 + $0x18] sm:$0xff] %vm394, 0.0
      $region52: #{se_basic_block.4} parent=47 // pred_fallthru
        _
      %v403 = vld [vmem:[%s370] sm:$0xff]
      %v404 = vld [vmem:[%s370 + $0x8] sm:$0xff]
      %v405 = vld [vmem:[%s370 + $0x10] sm:$0xff]
      %v406 = vld [vmem:[%s370 + $0x18] sm:$0xff]
      %v407 = vpack.c.bf16 %v404, %v403
      %v408 = vpack.c.bf16 %v406, %v405
      %v409 = vld [vmem:[%s1] sm:$0xf]
      %v410 = vld [vmem:[%s1 + $0x4] sm:$0xf]
      %v411 = vld [vmem:[%s1 + $0x8] sm:$0xf]
      %v412 = vld [vmem:[%s1 + $0xc] sm:$0xf]
      %v413 = vld [vmem:[%s2] sm:$0xff]
      %v414 = vld [vmem:[%s2 + $0x8] sm:$0xff]
      %v415 = vld [vmem:[%s2 + $0x10] sm:$0xff]
      %v416 = vld [vmem:[%s2 + $0x18] sm:$0xff]
      %418 = vset.pattern.permute.xlu0 0
      %419 = vperm.xlu0 %418, %v413
      %v420 = vpop.permute.xlu0 %419
      %423 = vset.pattern.permute.xlu0 0
      %424 = vperm.xlu0 %423, %v414
      %v425 = vpop.permute.xlu0 %424
      %428 = vset.pattern.permute.xlu0 0
      %429 = vperm.xlu0 %428, %v415
      %v430 = vpop.permute.xlu0 %429
      %433 = vset.pattern.permute.xlu0 0
      %434 = vperm.xlu0 %433, %v416
      %v435 = vpop.permute.xlu0 %434
      %v441 = vunpack.c.l.b16 %v409
      %v442 = vunpack.c.l.b16 %v410
      %v443 = vunpack.c.l.b16 %v411
      %v444 = vunpack.c.l.b16 %v412
      %v445 = vpack.c.b16 %v442, %v441
      %v446 = vpack.c.b16 %v444, %v443
      %vm447 = vcmask 261120
      %v449 = vsel %vm447, %v445, 0
      %v452 = vsel %vm447, %v446, 0
      %454 = vmatprep.subr.bf16.mxu0 0
      %455 = vmatpush1.bf16.msra.mxu0 %v407
      %456 = vmatprep.subr.bf16.mxu0 0
      %457 = vmatpush1.bf16.msra.mxu0 %v408
      %458 = vmatprep.subr.bf16.mxu0 0
      %459 = vmatpush1.bf16.msra.mxu0 0
      %460 = vmatprep.subr.bf16.mxu0 0
      %461 = vmatpush1.bf16.msra.mxu0 0
      %462 = vmatprep.subr.bf16.mxu0 0
      %463 = vmatpush1.bf16.msra.mxu0 0
      %464 = vmatprep.subr.bf16.mxu0 0
      %465 = vmatpush1.bf16.msra.mxu0 0
      %466 = vmatprep.subr.bf16.mxu0 0
      %467 = vmatpush1.bf16.msra.mxu0 0
      %468 = vmatprep.subr.bf16.mxu0 0
      %469 = vmatpush1.bf16.msra.mxu0 0
      %470 = vmatprep.subr.bf16.mxu0 0
      %471 = vmatpush1.bf16.msra.mxu0 0
      %472 = vmatprep.subr.bf16.mxu0 0
      %473 = vmatpush1.bf16.msra.mxu0 0
      %474 = vmatprep.subr.bf16.mxu0 0
      %475 = vmatpush1.bf16.msra.mxu0 0
      %476 = vmatprep.subr.bf16.mxu0 0
      %477 = vmatpush1.bf16.msra.mxu0 0
      %478 = vmatprep.subr.bf16.mxu0 0
      %479 = vmatpush1.bf16.msra.mxu0 0
      %480 = vmatprep.subr.bf16.mxu0 0
      %481 = vmatpush1.bf16.msra.mxu0 0
      %482 = vmatprep.subr.bf16.mxu0 0
      %483 = vmatpush1.bf16.msra.mxu0 0
      %484 = vmatprep.subr.bf16.mxu0 0
      %485 = vmatpush1.bf16.msra.mxu0 0
      %486 = vmatprep.mubr.bf16.mxu0 0
      %487 = vmatmul.mubr.bf16.gmra.mrb[0].mxu0 %v449
      %v488 = vpop.f32.mrb[0].mxu0
      %v489 = vadd.f32 %v420, %v488
      %v490 = vpop.f32.mrb[0].mxu0
      %v491 = vpop.f32.mrb[0].mxu0
      %v492 = vadd.f32 %v425, %v491
      %v493 = vpop.f32.mrb[0].mxu0
      %494 = vmatprep.mubr.bf16.mxu0 0
      %495 = vmatmul.mubr.bf16.gmra.mrb[0].mxu0 %v452
      %v496 = vpop.f32.mrb[0].mxu0
      %v497 = vadd.f32 %v430, %v496
      %v498 = vpop.f32.mrb[0].mxu0
      %v499 = vpop.f32.mrb[0].mxu0
      %v500 = vadd.f32 %v435, %v499
      %v501 = vpop.f32.mrb[0].mxu0
      %502 = vdwg.mxu0
      %v503 = vld [vmem:[%s3] sm:$0xff]
      %v504 = vld [vmem:[%s3 + $0x8] sm:$0xff]
      %v505 = vld [vmem:[%s3 + $0x10] sm:$0xff]
      %v506 = vld [vmem:[%s3 + $0x18] sm:$0xff]
      %508 = vset.pattern.permute.xlu0 0
      %509 = vperm.xlu0 %508, %v503
      %v510 = vpop.permute.xlu0 %509
      %513 = vset.pattern.permute.xlu0 0
      %514 = vperm.xlu0 %513, %v504
      %v515 = vpop.permute.xlu0 %514
      %518 = vset.pattern.permute.xlu0 0
      %519 = vperm.xlu0 %518, %v505
      %v520 = vpop.permute.xlu0 %519
      %523 = vset.pattern.permute.xlu0 0
      %524 = vperm.xlu0 %523, %v506
      %v525 = vpop.permute.xlu0 %524
      %v527 = vmul.f32 %v489, %v510
      %v528 = vmul.f32 %v492, %v515
      %v529 = vmul.f32 %v497, %v520
      %v530 = vmul.f32 %v500, %v525
      %v531 = vld [vmem:[%s4] sm:$0xff]
      %v532 = vld [vmem:[%s4 + $0x8] sm:$0xff]
      %v533 = vld [vmem:[%s4 + $0x10] sm:$0xff]
      %v534 = vld [vmem:[%s4 + $0x18] sm:$0xff]
      %536 = vset.pattern.permute.xlu0 0
      %537 = vperm.xlu0 %536, %v531
      %v538 = vpop.permute.xlu0 %537
      %541 = vset.pattern.permute.xlu0 0
      %542 = vperm.xlu0 %541, %v532
      %v543 = vpop.permute.xlu0 %542
      %546 = vset.pattern.permute.xlu0 0
      %547 = vperm.xlu0 %546, %v533
      %v548 = vpop.permute.xlu0 %547
      %551 = vset.pattern.permute.xlu0 0
      %552 = vperm.xlu0 %551, %v534
      %v553 = vpop.permute.xlu0 %552
      %v555 = vadd.f32 %v527, %v538
      %v556 = vadd.f32 %v528, %v543
      %v557 = vadd.f32 %v529, %v548
      %v558 = vadd.f32 %v530, %v553
      %v559 = vmax.f32 %v555, 0.0
      %v560 = vmax.f32 %v556, 0.0
      %v561 = vmax.f32 %v557, 0.0
      %v562 = vmax.f32 %v558, 0.0
      %v563 = vld [vmem:[%s5] sm:$0xf]
      %v564 = vld [vmem:[%s5 + $0x4] sm:$0xf]
      %v565 = vld [vmem:[%s5 + $0x8] sm:$0xf]
      %v566 = vld [vmem:[%s5 + $0xc] sm:$0xf]
      %v567 = vpack.c.bf16 %v560, %v559
      %v568 = vpack.c.bf16 %v562, %v561
      %v569 = vld [vmem:[%s6] sm:$0xff]
      %v570 = vld [vmem:[%s6 + $0x8] sm:$0xff]
      %v571 = vld [vmem:[%s6 + $0x10] sm:$0xff]
      %v572 = vld [vmem:[%s6 + $0x18] sm:$0xff]
      %574 = vset.pattern.permute.xlu0 0
      %575 = vperm.xlu0 %574, %v569
      %v576 = vpop.permute.xlu0 %575
      %579 = vset.pattern.permute.xlu0 0
      %580 = vperm.xlu0 %579, %v570
      %v581 = vpop.permute.xlu0 %580
      %584 = vset.pattern.permute.xlu0 0
      %585 = vperm.xlu0 %584, %v571
      %v586 = vpop.permute.xlu0 %585
      %589 = vset.pattern.permute.xlu0 0
      %590 = vperm.xlu0 %589, %v572
      %v591 = vpop.permute.xlu0 %590
      %v597 = vunpack.c.l.b16 %v563
      %v598 = vunpack.c.l.b16 %v564
      %v599 = vunpack.c.l.b16 %v565
      %v600 = vunpack.c.l.b16 %v566
      %v601 = vpack.c.b16 %v598, %v597
      %v602 = vpack.c.b16 %v600, %v599
      %v604 = vsel %vm447, %v601, 0
      %v607 = vsel %vm447, %v602, 0
      %609 = vmatprep.subr.bf16.mxu0 0
      %610 = vmatpush1.bf16.msra.mxu0 %v567
      %611 = vmatprep.subr.bf16.mxu0 0
      %612 = vmatpush1.bf16.msra.mxu0 %v568
      %613 = vmatprep.subr.bf16.mxu0 0
      %614 = vmatpush1.bf16.msra.mxu0 0
      %615 = vmatprep.subr.bf16.mxu0 0
      %616 = vmatpush1.bf16.msra.mxu0 0
      %617 = vmatprep.subr.bf16.mxu0 0
      %618 = vmatpush1.bf16.msra.mxu0 0
      %619 = vmatprep.subr.bf16.mxu0 0
      %620 = vmatpush1.bf16.msra.mxu0 0
      %621 = vmatprep.subr.bf16.mxu0 0
      %622 = vmatpush1.bf16.msra.mxu0 0
      %623 = vmatprep.subr.bf16.mxu0 0
      %624 = vmatpush1.bf16.msra.mxu0 0
      %625 = vmatprep.subr.bf16.mxu0 0
      %626 = vmatpush1.bf16.msra.mxu0 0
      %627 = vmatprep.subr.bf16.mxu0 0
      %628 = vmatpush1.bf16.msra.mxu0 0
      %629 = vmatprep.subr.bf16.mxu0 0
      %630 = vmatpush1.bf16.msra.mxu0 0
      %631 = vmatprep.subr.bf16.mxu0 0
      %632 = vmatpush1.bf16.msra.mxu0 0
      %633 = vmatprep.subr.bf16.mxu0 0
      %634 = vmatpush1.bf16.msra.mxu0 0
      %635 = vmatprep.subr.bf16.mxu0 0
      %636 = vmatpush1.bf16.msra.mxu0 0
      %637 = vmatprep.subr.bf16.mxu0 0
      %638 = vmatpush1.bf16.msra.mxu0 0
      %639 = vmatprep.subr.bf16.mxu0 0
      %640 = vmatpush1.bf16.msra.mxu0 0
      %641 = vmatprep.mubr.bf16.mxu0 0
      %642 = vmatmul.mubr.bf16.gmra.mrb[0].mxu0 %v604
      %v643 = vpop.f32.mrb[0].mxu0
      %v644 = vadd.f32 %v576, %v643
      %v645 = vpop.f32.mrb[0].mxu0
      %v646 = vpop.f32.mrb[0].mxu0
      %v647 = vadd.f32 %v581, %v646
      %v648 = vpop.f32.mrb[0].mxu0
      %649 = vmatprep.mubr.bf16.mxu0 0
      %650 = vmatmul.mubr.bf16.gmra.mrb[0].mxu0 %v607
      %v651 = vpop.f32.mrb[0].mxu0
      %v652 = vadd.f32 %v586, %v651
      %v653 = vpop.f32.mrb[0].mxu0
      %v654 = vpop.f32.mrb[0].mxu0
      %v655 = vadd.f32 %v591, %v654
      %v656 = vpop.f32.mrb[0].mxu0
      %657 = vdwg.mxu0
      %658 = vst [vmem:[%s378] sm:$0xff] %v644
      %659 = vst [vmem:[%s378 + $0x8] sm:$0xff] %v647
      %660 = vst [vmem:[%s378 + $0x10] sm:$0xff] %v652
      %661 = vst [vmem:[%s378 + $0x18] sm:$0xff] %v655
      %s662 = smul.u32 %s26, 128
      %v663 = vlaneseq
      %v664 = vand.u32 %v663, 127
      %v665 = vstv %s662
      %v666 = vadd.s32 %v665, %v664
      %vm667 = vcmp.lt.s32.totalorder %v666, 16
      %v668 = vsel %vm667, 1, 0
      %v669 = vcvt.s32.f32 %v668
      %v670 = vmul.f32 %v644, %v669
      %v671 = vmul.f32 %v647, %v669
      %v672 = vmul.f32 %v652, %v669
      %v673 = vmul.f32 %v655, %v669
      %v674 = vld [vmem:[%s383] sm:$0xff]
      %v675 = vld [vmem:[%s383 + $0x8] sm:$0xff]
      %v676 = vld [vmem:[%s383 + $0x10] sm:$0xff]
      %v677 = vld [vmem:[%s383 + $0x18] sm:$0xff]
      %678 = vadd.xlane.f32.xlu0 %v670
      %v679 = vpop.xlane.xlu0 %678
      %680 = vadd.xlane.f32.xlu0 %v671
      %v681 = vpop.xlane.xlu0 %680
      %682 = vadd.xlane.f32.xlu0 %v672
      %v683 = vpop.xlane.xlu0 %682
      %684 = vadd.xlane.f32.xlu0 %v673
      %v685 = vpop.xlane.xlu0 %684
      %v686 = vadd.f32 %v674, %v679
      %v687 = vadd.f32 %v675, %v681
      %v688 = vadd.f32 %v676, %v683
      %v689 = vadd.f32 %v677, %v685
      %vm690 = vcmask 7168
      %691 = vst.msk [vmem:[%s383] sm:$0xff] %vm690, %v686
      %692 = vst.msk [vmem:[%s383 + $0x8] sm:$0xff] %vm690, %v687
      %693 = vst.msk [vmem:[%s383 + $0x10] sm:$0xff] %vm690, %v688
      %694 = vst.msk [vmem:[%s383 + $0x18] sm:$0xff] %vm690, %v689
      %v695 = vld [vmem:[%s388] sm:$0xff]
      %v696 = vld [vmem:[%s388 + $0x8] sm:$0xff]
      %v697 = vld [vmem:[%s388 + $0x10] sm:$0xff]
      %v698 = vld [vmem:[%s388 + $0x18] sm:$0xff]
      %v699 = vmul.f32 %v670, %v670
      %v700 = vmul.f32 %v671, %v671
      %v701 = vmul.f32 %v672, %v672
      %v702 = vmul.f32 %v673, %v673
      %703 = vadd.xlane.f32.xlu0 %v699
      %v704 = vpop.xlane.xlu0 %703
      %705 = vadd.xlane.f32.xlu0 %v700
      %v706 = vpop.xlane.xlu0 %705
      %707 = vadd.xlane.f32.xlu0 %v701
      %v708 = vpop.xlane.xlu0 %707
      %709 = vadd.xlane.f32.xlu0 %v702
      %v710 = vpop.xlane.xlu0 %709
      %v711 = vadd.f32 %v695, %v704
      %v712 = vadd.f32 %v696, %v706
      %v713 = vadd.f32 %v697, %v708
      %v714 = vadd.f32 %v698, %v710
      %715 = vst.msk [vmem:[%s388] sm:$0xff] %vm690, %v711
      %716 = vst.msk [vmem:[%s388 + $0x8] sm:$0xff] %vm690, %v712
      %717 = vst.msk [vmem:[%s388 + $0x10] sm:$0xff] %vm690, %v713
      %718 = vst.msk [vmem:[%s388 + $0x18] sm:$0xff] %vm690, %v714
      %p719 = scmp.lt.s32.totalorder %s25, 1
      %s720 = scalar_select %p719, %s25, 1
      %p721 = scmp.lt.s32.totalorder %s26, 0
      %s722 = scalar_select %p721, %s26, 0
      %s723 = smul.addr %s720, 4
      %s724 = sadd.s32 %s722, %s723
      %s725 = smul.addr %s724, 8
      %s726 = scalar_lea.vmem %s7, %s725
      %p727 = scmp.lt.s32.totalorder %s25, 1
      %s728 = scalar_select %p727, %s25, 1
      %s729 = smul.addr %s728, 4
      %s730 = smul.addr %s729, 8
      %s731 = scalar_lea.vmem %s8, %s730
      %p732 = scmp.lt.s32.totalorder %s25, 1
      %s733 = scalar_select %p732, %s25, 1
      %s734 = smul.addr %s733, 4
      %s735 = smul.addr %s734, 8
      %s736 = scalar_lea.vmem %s9, %s735
      // Predicated region
      $region53: #{se_basic_block.4} parent=47 // pred_check
        %p737 = pneg %p207
      $region54: #{se_basic_block.4} parent=47 // pred_check_branch
        %739 = sbr.rel (%p737) target = $region56
      $region55: #{se_basic_block.4} parent=47 // pred_region
        _
      $region56: #{se_basic_block.4} parent=47 // pred_fallthru
        _
      // Predicated region
      $region57: #{se_basic_block.4} parent=47 // pred_check
        %p740 = pneg %p233
      $region58: #{se_basic_block.4} parent=47 // pred_check_branch
        %742 = sbr.rel (%p740) target = $region60
      $region59: #{se_basic_block.4} parent=47 // pred_region
        _
      $region60: #{se_basic_block.4} parent=47 // pred_fallthru
        _
      // Predicated region
      $region61: #{se_basic_block.4} parent=47 // pred_check
        %p743 = pneg %p259
      $region62: #{se_basic_block.4} parent=47 // pred_check_branch
        %745 = sbr.rel (%p743) target = $region64
      $region63: #{se_basic_block.4} parent=47 // pred_region
        _
      $region64: #{se_basic_block.4} parent=47 // pred_fallthru
        _
    $region48: #{se_basic_block.4} parent=5 // pred_fallthru
      _
    %p746 = scmp.le.s32.totalorder 2, %s16
    // Predicated region
    $region65: #{se_basic_block.4} parent=5 // pred_check
      %p747 = pneg %p746
    $region66: #{se_basic_block.4} parent=5 // pred_check_branch
      %749 = sbr.rel (%p747) target = $region68
    $region67: #{se_basic_block.4} parent=5 // pred_region
      %s750 = ssub.s32 %s16, 2
      // Predicated region
      $region69: #{se_basic_block.4} parent=67 // pred_check
        %p751 = pneg %p213
      $region70: #{se_basic_block.4} parent=67 // pred_check_branch
        %753 = sbr.rel (%p751) target = $region72
      $region71: #{se_basic_block.4} parent=67 // pred_region
        %p754 = scmp.lt.s32.totalorder %s27, 1
        %s755 = scalar_select %p754, %s27, 1
        %p756 = scmp.lt.s32.totalorder %s28, 0
        %s757 = scalar_select %p756, %s28, 0
        %s758 = smul.addr %s755, 4
        %s759 = sadd.s32 %s757, %s758
        %s760 = smul.addr %s759, 8
        %s761 = scalar_lea.vmem %s7, %s760
      $region72: #{se_basic_block.4} parent=67 // pred_fallthru
        _
      // Predicated region
      $region73: #{se_basic_block.4} parent=67 // pred_check
        %p762 = pneg %p239
      $region74: #{se_basic_block.4} parent=67 // pred_check_branch
        %764 = sbr.rel (%p762) target = $region76
      $region75: #{se_basic_block.4} parent=67 // pred_region
        %p765 = scmp.lt.s32.totalorder %s27, 1
        %s766 = scalar_select %p765, %s27, 1
        %s767 = smul.addr %s766, 4
        %s768 = smul.addr %s767, 8
        %s769 = scalar_lea.vmem %s8, %s768
      $region76: #{se_basic_block.4} parent=67 // pred_fallthru
        _
      // Predicated region
      $region77: #{se_basic_block.4} parent=67 // pred_check
        %p770 = pneg %p265
      $region78: #{se_basic_block.4} parent=67 // pred_check_branch
        %772 = sbr.rel (%p770) target = $region80
      $region79: #{se_basic_block.4} parent=67 // pred_region
        %p773 = scmp.lt.s32.totalorder %s27, 1
        %s774 = scalar_select %p773, %s27, 1
        %s775 = smul.addr %s774, 4
        %s776 = smul.addr %s775, 8
        %s777 = scalar_lea.vmem %s9, %s776
      $region80: #{se_basic_block.4} parent=67 // pred_fallthru
        _
    $region68: #{se_basic_block.4} parent=5 // pred_fallthru
      _
  $region6: #{se_basic_block.4} parent=0 // loop_footer
    %s20 = sadd.s32 1, %s16
  $region7: #{se_basic_block.4} parent=0 // loop_footer_branch
    %15 = sbr.rel target = $region3
  $region8: #{se_basic_block.4} parent=0 // loop_exit
    _

// kernel: se_basic_block.5
$region0: #{se_basic_block.5}
  #allocation0 [shape = 'u32[]', space=smem, size = 0x4, offset = 0x4, fixed_abs, tag = 'smem constant byte address 0x4 - core index']
  #allocation1 [shape = 'u32[144,128]{1,0:T(1,128)}', space=vmem, size = 0x12000, scoped, tag = 'internal scratch']
  %s0 = inlined_call_operand.vmem [shape: f32[2,32,128], index: 0, kind: input, shape index: {}]
  %s1 = inlined_call_operand.vmem [shape: f32[2,32,128], index: 1, kind: input, shape index: {}]
  %s2 = inlined_call_operand.vmem [shape: f32[32,1], index: 2, kind: input, shape index: {}]
  %s3 = inlined_call_operand.vmem [shape: f32[32,1], index: 3, kind: input, shape index: {}]
  %s4 = inlined_call_operand.vmem [shape: f32[2,32,1], index: 4, kind: input, shape index: {}]
  %s5 = inlined_call_operand.vmem [shape: f32[2,32,128], index: 5, kind: output, shape index: {}]
  %s6 = sld [smem:[#allocation0]]
  $region53: #{se_basic_block.5} parent=0
    _
  %s8 = ssub.s32 1, %s6
  %s9 = scalar_select 0, %s8, %s6
  loop: start=0, step=1, limit=4
  $region2: #{se_basic_block.5} parent=0 // loop_pre_header
    _
  $region3: #{se_basic_block.5} parent=0 // loop_header
    %s11 = sphi 0, %s15
    %p12 = scmp.ge.s32.totalorder %s11, 4
    %s18 = sphi 0, %s30
    %s19 = sphi 0, %s26
    %s20 = sphi 0, %s18
    %s21 = sphi 0, %s19
    %s22 = sphi 0, %s20
    %s23 = sphi 0, %s21
    %s35 = sphi 0, %s37
    %s38 = sphi 0, %s35
    %s39 = sphi 0, %s38
    %s55 = sphi 0, %s39
    %s63 = sphi 0, %s65
    %s66 = sphi 0, %s63
    %s67 = sphi 0, %s66
    %s83 = sphi 0, %s67
    %s87 = sphi 0, %s87
    %s89 = sphi 0, %s87
    %s90 = sphi 0, %s89
    %s104 = sphi 0, %s90
    %s108 = sphi 0, %s108
    %s110 = sphi 0, %s108
    %s111 = sphi 0, %s110
    %s125 = sphi 0, %s111
    %s131 = sphi 0, %s133
    %s134 = sphi 0, %s131
    %s135 = sphi 0, %s134
    %s151 = sphi 0, %s135
    %s159 = sphi 0, %s161
    %s162 = sphi 0, %s159
    %s163 = sphi 0, %s162
    %s179 = sphi 0, %s163
  $region4: #{se_basic_block.5} parent=0 // loop_header_branch
    %14 = sbr.rel (%p12) target = $region8
  $region5: #{se_basic_block.5} parent=0 // loop_body
    %s16 = ssub.s32 %s11, 1
    %s17 = ssub.s32 %s11, 2
    %s24 = sadd.s32 1, %s19
    %p25 = scmp.ge.s32.totalorder %s24, 1
    %s26 = scalar_select %p25, 0, %s24
    %s27 = sadd.s32 1, %s18
    %s28 = scalar_select %p25, %s27, %s18
    %p29 = scmp.ge.s32.totalorder %s28, 2
    %s30 = scalar_select %p29, 0, %s28
    %s31 = ssub.s32 %s18, %s30
    %s32 = ssub.s32 %s19, %s26
    %s33 = sor.u32 %s31, %s32
    %p34 = scmp.eq.s32.totalorder %s33, 0
    %s36 = sadd.s32 %s35, 1
    %s37 = scalar_select %p34, %s35, %s36
    %p40 = pneg %p34
    %p41 = scmp.eq.s32.totalorder %s11, 1
    %p42 = por %p40, %p41
    %p43 = scmp.ne.s32.totalorder %s35, %s38
    %p44 = scmp.eq.s32.totalorder %s11, 0
    %p45 = por %p43, %p44
    %p46 = scmp.ne.s32.totalorder %s35, %s38
    %p47 = scmp.eq.s32.totalorder %s16, 1
    %p48 = por %p46, %p47
    %p49 = scmp.ne.s32.totalorder %s38, %s39
    %p50 = scmp.eq.s32.totalorder %s16, 0
    %p51 = por %p49, %p50
    %p52 = scmp.ne.s32.totalorder %s38, %s39
    %p53 = scmp.eq.s32.totalorder %s17, 1
    %p54 = por %p52, %p53
    %p56 = scmp.ne.s32.totalorder %s39, %s55
    %p57 = scmp.eq.s32.totalorder %s17, 0
    %p58 = por %p56, %p57
    %s59 = ssub.s32 %s18, %s30
    %s60 = ssub.s32 %s19, %s26
    %s61 = sor.u32 %s59, %s60
    %p62 = scmp.eq.s32.totalorder %s61, 0
    %s64 = sadd.s32 %s63, 1
    %s65 = scalar_select %p62, %s63, %s64
    %p68 = pneg %p62
    %p69 = scmp.eq.s32.totalorder %s11, 1
    %p70 = por %p68, %p69
    %p71 = scmp.ne.s32.totalorder %s63, %s66
    %p72 = scmp.eq.s32.totalorder %s11, 0
    %p73 = por %p71, %p72
    %p74 = scmp.ne.s32.totalorder %s63, %s66
    %p75 = scmp.eq.s32.totalorder %s16, 1
    %p76 = por %p74, %p75
    %p77 = scmp.ne.s32.totalorder %s66, %s67
    %p78 = scmp.eq.s32.totalorder %s16, 0
    %p79 = por %p77, %p78
    %p80 = scmp.ne.s32.totalorder %s66, %s67
    %p81 = scmp.eq.s32.totalorder %s17, 1
    %p82 = por %p80, %p81
    %p84 = scmp.ne.s32.totalorder %s67, %s83
    %p85 = scmp.eq.s32.totalorder %s17, 0
    %p86 = por %p84, %p85
    %s88 = sadd.s32 %s87, 1
    %p91 = scmp.eq.s32.totalorder %s11, 1
    %p92 = scmp.ne.s32.totalorder %s87, %s89
    %p93 = scmp.eq.s32.totalorder %s11, 0
    %p94 = por %p92, %p93
    %p95 = scmp.ne.s32.totalorder %s87, %s89
    %p96 = scmp.eq.s32.totalorder %s16, 1
    %p97 = por %p95, %p96
    %p98 = scmp.ne.s32.totalorder %s89, %s90
    %p99 = scmp.eq.s32.totalorder %s16, 0
    %p100 = por %p98, %p99
    %p101 = scmp.ne.s32.totalorder %s89, %s90
    %p102 = scmp.eq.s32.totalorder %s17, 1
    %p103 = por %p101, %p102
    %p105 = scmp.ne.s32.totalorder %s90, %s104
    %p106 = scmp.eq.s32.totalorder %s17, 0
    %p107 = por %p105, %p106
    %s109 = sadd.s32 %s108, 1
    %p112 = scmp.eq.s32.totalorder %s11, 1
    %p113 = scmp.ne.s32.totalorder %s108, %s110
    %p114 = scmp.eq.s32.totalorder %s11, 0
    %p115 = por %p113, %p114
    %p116 = scmp.ne.s32.totalorder %s108, %s110
    %p117 = scmp.eq.s32.totalorder %s16, 1
    %p118 = por %p116, %p117
    %p119 = scmp.ne.s32.totalorder %s110, %s111
    %p120 = scmp.eq.s32.totalorder %s16, 0
    %p121 = por %p119, %p120
    %p122 = scmp.ne.s32.totalorder %s110, %s111
    %p123 = scmp.eq.s32.totalorder %s17, 1
    %p124 = por %p122, %p123
    %p126 = scmp.ne.s32.totalorder %s111, %s125
    %p127 = scmp.eq.s32.totalorder %s17, 0
    %p128 = por %p126, %p127
    %s129 = ssub.s32 %s18, %s30
    %p130 = scmp.eq.s32.totalorder %s129, 0
    %s132 = sadd.s32 %s131, 1
    %s133 = scalar_select %p130, %s131, %s132
    %p136 = pneg %p130
    %p137 = scmp.eq.s32.totalorder %s11, 1
    %p138 = por %p136, %p137
    %p139 = scmp.ne.s32.totalorder %s131, %s134
    %p140 = scmp.eq.s32.totalorder %s11, 0
    %p141 = por %p139, %p140
    %p142 = scmp.ne.s32.totalorder %s131, %s134
    %p143 = scmp.eq.s32.totalorder %s16, 1
    %p144 = por %p142, %p143
    %p145 = scmp.ne.s32.totalorder %s134, %s135
    %p146 = scmp.eq.s32.totalorder %s16, 0
    %p147 = por %p145, %p146
    %p148 = scmp.ne.s32.totalorder %s134, %s135
    %p149 = scmp.eq.s32.totalorder %s17, 1
    %p150 = por %p148, %p149
    %p152 = scmp.ne.s32.totalorder %s135, %s151
    %p153 = scmp.eq.s32.totalorder %s17, 0
    %p154 = por %p152, %p153
    %s155 = ssub.s32 %s18, %s30
    %s156 = ssub.s32 %s19, %s26
    %s157 = sor.u32 %s155, %s156
    %p158 = scmp.eq.s32.totalorder %s157, 0
    %s160 = sadd.s32 %s159, 1
    %s161 = scalar_select %p158, %s159, %s160
    %p164 = pneg %p158
    %p165 = scmp.eq.s32.totalorder %s11, 1
    %p166 = por %p164, %p165
    %p167 = scmp.ne.s32.totalorder %s159, %s162
    %p168 = scmp.eq.s32.totalorder %s11, 0
    %p169 = por %p167, %p168
    %p170 = scmp.ne.s32.totalorder %s159, %s162
    %p171 = scmp.eq.s32.totalorder %s16, 1
    %p172 = por %p170, %p171
    %p173 = scmp.ne.s32.totalorder %s162, %s163
    %p174 = scmp.eq.s32.totalorder %s16, 0
    %p175 = por %p173, %p174
    %p176 = scmp.ne.s32.totalorder %s162, %s163
    %p177 = scmp.eq.s32.totalorder %s17, 1
    %p178 = por %p176, %p177
    %p180 = scmp.ne.s32.totalorder %s163, %s179
    %p181 = scmp.eq.s32.totalorder %s17, 0
    %p182 = por %p180, %p181
    %p183 = scmp.le.s32.totalorder 1, %s11
    %p184 = scmp.lt.s32.totalorder %s11, 3
    %p185 = pnand %p183, %p184
    %p186 = pneg %p185
    // Predicated region
    $region9: #{se_basic_block.5} parent=5 // pred_check
      _
    $region10: #{se_basic_block.5} parent=5 // pred_check_branch
      %188 = sbr.rel (%p185) target = $region12
    $region11: #{se_basic_block.5} parent=5 // pred_region
      %s189 = ssub.s32 %s11, 1
      // Predicated region
      $region13: #{se_basic_block.5} parent=11 // pred_check
        %p190 = pneg %p100
      $region14: #{se_basic_block.5} parent=11 // pred_check_branch
        %192 = sbr.rel (%p190) target = $region16
      $region15: #{se_basic_block.5} parent=11 // pred_region
        _
      $region16: #{se_basic_block.5} parent=11 // pred_fallthru
        _
      // Predicated region
      $region17: #{se_basic_block.5} parent=11 // pred_check
        %p193 = pneg %p121
      $region18: #{se_basic_block.5} parent=11 // pred_check_branch
        %195 = sbr.rel (%p193) target = $region20
      $region19: #{se_basic_block.5} parent=11 // pred_region
        _
      $region20: #{se_basic_block.5} parent=11 // pred_fallthru
        _
    $region12: #{se_basic_block.5} parent=5 // pred_fallthru
      _
    %p196 = scmp.lt.s32.totalorder %s11, 2
    // Predicated region
    $region21: #{se_basic_block.5} parent=5 // pred_check
      %p197 = pneg %p196
    $region22: #{se_basic_block.5} parent=5 // pred_check_branch
      %199 = sbr.rel (%p197) target = $region24
    $region23: #{se_basic_block.5} parent=5 // pred_region
      // Predicated region
      $region25: #{se_basic_block.5} parent=23 // pred_check
        %p200 = pneg %p45
      $region26: #{se_basic_block.5} parent=23 // pred_check_branch
        %202 = sbr.rel (%p200) target = $region28
      $region27: #{se_basic_block.5} parent=23 // pred_region
        %p203 = scmp.lt.s32.totalorder %s18, 1
        %s204 = scalar_select %p203, %s18, 1
        %p205 = scmp.lt.s32.totalorder %s19, 0
        %s206 = scalar_select %p205, %s19, 0
        %s207 = smul.addr %s204, 4
        %s208 = sadd.s32 %s206, %s207
        %s209 = smul.addr %s208, 8
        %s210 = scalar_lea.vmem %s0, %s209
      $region28: #{se_basic_block.5} parent=23 // pred_fallthru
        _
      // Predicated region
      $region29: #{se_basic_block.5} parent=23 // pred_check
        %p211 = pneg %p73
      $region30: #{se_basic_block.5} parent=23 // pred_check_branch
        %213 = sbr.rel (%p211) target = $region32
      $region31: #{se_basic_block.5} parent=23 // pred_region
        %p214 = scmp.lt.s32.totalorder %s18, 1
        %s215 = scalar_select %p214, %s18, 1
        %p216 = scmp.lt.s32.totalorder %s19, 0
        %s217 = scalar_select %p216, %s19, 0
        %s218 = smul.addr %s215, 4
        %s219 = sadd.s32 %s217, %s218
        %s220 = smul.addr %s219, 8
        %s221 = scalar_lea.vmem %s1, %s220
      $region32: #{se_basic_block.5} parent=23 // pred_fallthru
        _
      // Predicated region
      $region33: #{se_basic_block.5} parent=23 // pred_check
        %p222 = pneg %p141
      $region34: #{se_basic_block.5} parent=23 // pred_check_branch
        %224 = sbr.rel (%p222) target = $region36
      $region35: #{se_basic_block.5} parent=23 // pred_region
        %p225 = scmp.lt.s32.totalorder %s18, 1
        %s226 = scalar_select %p225, %s18, 1
        %s227 = smul.addr %s226, 4
        %s228 = smul.addr %s227, 8
        %s229 = scalar_lea.vmem %s4, %s228
      $region36: #{se_basic_block.5} parent=23 // pred_fallthru
        _
    $region24: #{se_basic_block.5} parent=5 // pred_fallthru
      _
    %p230 = scmp.le.s32.totalorder 1, %s11
    %p231 = scmp.lt.s32.totalorder %s11, 3
    %p232 = pnand %p230, %p231
    %p233 = pneg %p232
    // Predicated region
    $region37: #{se_basic_block.5} parent=5 // pred_check
      _
    $region38: #{se_basic_block.5} parent=5 // pred_check_branch
      %235 = sbr.rel (%p232) target = $region40
    $region39: #{se_basic_block.5} parent=5 // pred_region
      %s236 = ssub.s32 %s11, 1
      %p237 = scmp.lt.s32.totalorder %s20, 1
      %s238 = scalar_select %p237, %s20, 1
      %p239 = scmp.lt.s32.totalorder %s21, 0
      %s240 = scalar_select %p239, %s21, 0
      %s241 = smul.addr %s238, 4
      %s242 = sadd.s32 %s240, %s241
      %s243 = smul.addr %s242, 8
      %s244 = scalar_lea.vmem %s0, %s243
      %p245 = pneg %p51
      %p246 = pneg %p48
      %p247 = scmp.lt.s32.totalorder %s20, 1
      %s248 = scalar_select %p247, %s20, 1
      %p249 = scmp.lt.s32.totalorder %s21, 0
      %s250 = scalar_select %p249, %s21, 0
      %s251 = smul.addr %s248, 4
      %s252 = sadd.s32 %s250, %s251
      %s253 = smul.addr %s252, 8
      %s254 = scalar_lea.vmem %s1, %s253
      %p255 = pneg %p79
      %p256 = pneg %p76
      %p257 = pneg %p100
      %p258 = pneg %p97
      %p259 = pneg %p121
      %p260 = pneg %p118
      %p261 = scmp.lt.s32.totalorder %s20, 1
      %s262 = scalar_select %p261, %s20, 1
      %s263 = smul.addr %s262, 4
      %s264 = smul.addr %s263, 8
      %s265 = scalar_lea.vmem %s4, %s264
      %p266 = pneg %p147
      %p267 = pneg %p144
      %p268 = pneg %p175
      %p269 = pneg %p172
      %p270 = scmp.lt.s32.totalorder %s20, 1
      %s271 = scalar_select %p270, %s20, 1
      %p272 = scmp.lt.s32.totalorder %s21, 0
      %s273 = scalar_select %p272, %s21, 0
      %s274 = smul.addr %s271, 4
      %s275 = sadd.s32 %s273, %s274
      %s276 = smul.addr %s275, 8
      %s277 = scalar_lea.vmem %s5, %s276
      %p278 = scmp.lt.s32.totalorder %s20, 1
      %s279 = scalar_select %p278, %s20, 1
      %p280 = scmp.lt.s32.totalorder %s21, 0
      %s281 = scalar_select %p280, %s21, 0
      %s282 = smul.addr %s279, 4
      %s283 = sadd.s32 %s281, %s282
      %s284 = smul.addr %s283, 8
      %s285 = scalar_lea.vmem %s0, %s284
      %p286 = scmp.lt.s32.totalorder %s20, 1
      %s287 = scalar_select %p286, %s20, 1
      %p288 = scmp.lt.s32.totalorder %s21, 0
      %s289 = scalar_select %p288, %s21, 0
      %s290 = smul.addr %s287, 4
      %s291 = sadd.s32 %s289, %s290
      %s292 = smul.addr %s291, 8
      %s293 = scalar_lea.vmem %s1, %s292
      %p294 = scmp.lt.s32.totalorder %s20, 1
      %s295 = scalar_select %p294, %s20, 1
      %s296 = smul.addr %s295, 4
      %s297 = smul.addr %s296, 8
      %s298 = scalar_lea.vmem %s4, %s297
      %p299 = scmp.lt.s32.totalorder %s20, 1
      %s300 = scalar_select %p299, %s20, 1
      %p301 = scmp.lt.s32.totalorder %s21, 0
      %s302 = scalar_select %p301, %s21, 0
      %s303 = smul.addr %s300, 4
      %s304 = sadd.s32 %s302, %s303
      %s305 = smul.addr %s304, 8
      %s306 = scalar_lea.vmem %s5, %s305
      %v307 = vld [vmem:[%s293] sm:$0xff]
      %v308 = vld [vmem:[%s293 + $0x8] sm:$0xff]
      %v309 = vld [vmem:[%s293 + $0x10] sm:$0xff]
      %v310 = vld [vmem:[%s293 + $0x18] sm:$0xff]
      %v311 = vld [vmem:[%s2] sm:$0xff]
      %v312 = vld [vmem:[%s2 + $0x8] sm:$0xff]
      %v313 = vld [vmem:[%s2 + $0x10] sm:$0xff]
      %v314 = vld [vmem:[%s2 + $0x18] sm:$0xff]
      %316 = vset.pattern.permute.xlu0 0
      %317 = vperm.xlu0 %316, %v311
      %v318 = vpop.permute.xlu0 %317
      %321 = vset.pattern.permute.xlu0 0
      %322 = vperm.xlu0 %321, %v312
      %v323 = vpop.permute.xlu0 %322
      %326 = vset.pattern.permute.xlu0 0
      %327 = vperm.xlu0 %326, %v313
      %v328 = vpop.permute.xlu0 %327
      %331 = vset.pattern.permute.xlu0 0
      %332 = vperm.xlu0 %331, %v314
      %v333 = vpop.permute.xlu0 %332
      %v335 = vmul.f32 %v307, %v318
      %v336 = vmul.f32 %v308, %v323
      %v337 = vmul.f32 %v309, %v328
      %v338 = vmul.f32 %v310, %v333
      %v339 = vld [vmem:[%s3] sm:$0xff]
      %v340 = vld [vmem:[%s3 + $0x8] sm:$0xff]
      %v341 = vld [vmem:[%s3 + $0x10] sm:$0xff]
      %v342 = vld [vmem:[%s3 + $0x18] sm:$0xff]
      %344 = vset.pattern.permute.xlu0 0
      %345 = vperm.xlu0 %344, %v339
      %v346 = vpop.permute.xlu0 %345
      %349 = vset.pattern.permute.xlu0 0
      %350 = vperm.xlu0 %349, %v340
      %v351 = vpop.permute.xlu0 %350
      %354 = vset.pattern.permute.xlu0 0
      %355 = vperm.xlu0 %354, %v341
      %v356 = vpop.permute.xlu0 %355
      %359 = vset.pattern.permute.xlu0 0
      %360 = vperm.xlu0 %359, %v342
      %v361 = vpop.permute.xlu0 %360
      %v363 = vadd.f32 %v335, %v346
      %v364 = vadd.f32 %v336, %v351
      %v365 = vadd.f32 %v337, %v356
      %v366 = vadd.f32 %v338, %v361
      %v367 = vld [vmem:[%s298] sm:$0xff]
      %v368 = vld [vmem:[%s298 + $0x8] sm:$0xff]
      %v369 = vld [vmem:[%s298 + $0x10] sm:$0xff]
      %v370 = vld [vmem:[%s298 + $0x18] sm:$0xff]
      %372 = vset.pattern.permute.xlu0 0
      %373 = vperm.xlu0 %372, %v367
      %v374 = vpop.permute.xlu0 %373
      %377 = vset.pattern.permute.xlu0 0
      %378 = vperm.xlu0 %377, %v368
      %v379 = vpop.permute.xlu0 %378
      %382 = vset.pattern.permute.xlu0 0
      %383 = vperm.xlu0 %382, %v369
      %v384 = vpop.permute.xlu0 %383
      %387 = vset.pattern.permute.xlu0 0
      %388 = vperm.xlu0 %387, %v370
      %v389 = vpop.permute.xlu0 %388
      %v391 = vmul.f32 %v363, %v374
      %v392 = vmul.f32 %v364, %v379
      %v393 = vmul.f32 %v365, %v384
      %v394 = vmul.f32 %v366, %v389
      %v395 = vld [vmem:[%s285] sm:$0xff]
      %v396 = vld [vmem:[%s285 + $0x8] sm:$0xff]
      %v397 = vld [vmem:[%s285 + $0x10] sm:$0xff]
      %v398 = vld [vmem:[%s285 + $0x18] sm:$0xff]
      %v399 = vadd.f32 %v391, %v395
      %v400 = vadd.f32 %v392, %v396
      %v401 = vadd.f32 %v393, %v397
      %v402 = vadd.f32 %v394, %v398
      %v403 = vmax.f32 %v399, 0.0
      %v404 = vmax.f32 %v400, 0.0
      %v405 = vmax.f32 %v401, 0.0
      %v406 = vmax.f32 %v402, 0.0
      %407 = vst [vmem:[%s306] sm:$0xff] %v403
      %408 = vst [vmem:[%s306 + $0x8] sm:$0xff] %v404
      %409 = vst [vmem:[%s306 + $0x10] sm:$0xff] %v405
      %410 = vst [vmem:[%s306 + $0x18] sm:$0xff] %v406
      %p411 = scmp.lt.s32.totalorder %s20, 1
      %s412 = scalar_select %p411, %s20, 1
      %p413 = scmp.lt.s32.totalorder %s21, 0
      %s414 = scalar_select %p413, %s21, 0
      %s415 = smul.addr %s412, 4
      %s416 = sadd.s32 %s414, %s415
      %s417 = smul.addr %s416, 8
      %s418 = scalar_lea.vmem %s5, %s417
      // Predicated region
      $region41: #{se_basic_block.5} parent=39 // pred_check
        %p419 = pneg %p172
      $region42: #{se_basic_block.5} parent=39 // pred_check_branch
        %421 = sbr.rel (%p419) target = $region44
      $region43: #{se_basic_block.5} parent=39 // pred_region
        _
      $region44: #{se_basic_block.5} parent=39 // pred_fallthru
        _
    $region40: #{se_basic_block.5} parent=5 // pred_fallthru
      _
    %p422 = scmp.le.s32.totalorder 2, %s11
    // Predicated region
    $region45: #{se_basic_block.5} parent=5 // pred_check
      %p423 = pneg %p422
    $region46: #{se_basic_block.5} parent=5 // pred_check_branch
      %425 = sbr.rel (%p423) target = $region48
    $region47: #{se_basic_block.5} parent=5 // pred_region
      %s426 = ssub.s32 %s11, 2
      // Predicated region
      $region49: #{se_basic_block.5} parent=47 // pred_check
        %p427 = pneg %p178
      $region50: #{se_basic_block.5} parent=47 // pred_check_branch
        %429 = sbr.rel (%p427) target = $region52
      $region51: #{se_basic_block.5} parent=47 // pred_region
        %p430 = scmp.lt.s32.totalorder %s22, 1
        %s431 = scalar_select %p430, %s22, 1
        %p432 = scmp.lt.s32.totalorder %s23, 0
        %s433 = scalar_select %p432, %s23, 0
        %s434 = smul.addr %s431, 4
        %s435 = sadd.s32 %s433, %s434
        %s436 = smul.addr %s435, 8
        %s437 = scalar_lea.vmem %s5, %s436
      $region52: #{se_basic_block.5} parent=47 // pred_fallthru
        _
    $region48: #{se_basic_block.5} parent=5 // pred_fallthru
      _
  $region6: #{se_basic_block.5} parent=0 // loop_footer
    %s15 = sadd.s32 1, %s11
  $region7: #{se_basic_block.5} parent=0 // loop_footer_branch
    %10 = sbr.rel target = $region3
  $region8: #{se_basic_block.5} parent=0 // loop_exit
    _

</llo_original>
